<compile_context>
chip_gen: v7x
topology: tpu7x:2x2x1
jax: 0.10.0
libtpu: 0.0.40
codegen_flags: <defaults>
</compile_context>

<pallas_src>
import functools

import jax
import jax.numpy as jnp
from jax import lax
from jax.experimental import pallas as pl
from jax.experimental.pallas import tpu as pltpu

PAD = 2        # hard-coded padding=2 in the PyTorch module (spatial-preserving for K=5)
BN_EPS = 1e-5


def round_up(a, b):
    return ((a + b - 1) // b) * b


# ---------------------------------------------------------------------------
# Kernel: NB batch elements per grid step; everything stays in the fused
# lane-dense (rows, W*C) layout with W*C an exact multiple of 128.
# ---------------------------------------------------------------------------
def dwconv_block_kernel(x_ref, dwb1_ref, pwbd1_ref, dwb2_ref, pwbd2_ref,
                        b1_ref, b2_ref, b3_ref, b4_ref, rowmask_ref, o_ref,
                        *, K, NB, H1P, H2, WC):
    x = x_ref[...]                                       # (NB, HIN, WC) bf16

    # ---- stage 1: depthwise KxK (BN1 scale folded) — K taps fused into ONE matmul
    # with a K*WC-wide contraction against the stacked banded weight.
    conc1 = jnp.concatenate([x[:, dy:dy + H1P, :] for dy in range(K)], axis=-1)
    conc1 = conc1.reshape(NB * H1P, K * WC)              # (M1, K*WC) bf16
    h = jnp.dot(conc1, dwb1_ref[...], preferred_element_type=jnp.float32)
    h = jnp.maximum(h + b1_ref[...], 0.0)                # BN1 bias + ReLU   (M1, WC) f32

    # ---- stage 2: 1x1 conv as block-diagonal matmul (BN2 scale folded) + bias, then
    # zero the H pad rows so stage 3 sees a properly zero-padded activation.
    h = jnp.dot(h.astype(jnp.bfloat16), pwbd1_ref[...],
                preferred_element_type=jnp.float32)
    h = (h + b2_ref[...]) * rowmask_ref[...]             # rows-only mask (M1, 1)

    # ---- stage 3: depthwise KxK (BN3 scale folded), same K-tap-fused formulation.
    hb = h.reshape(NB, H1P, WC).astype(jnp.bfloat16)
    conc2 = jnp.concatenate([hb[:, dy:dy + H2, :] for dy in range(K)], axis=-1)
    conc2 = conc2.reshape(NB * H2, K * WC)               # (M2, K*WC) bf16
    g = jnp.dot(conc2, dwb2_ref[...], preferred_element_type=jnp.float32)
    g = jnp.maximum(g + b3_ref[...], 0.0)                # BN3 bias + ReLU   (M2, WC) f32

    # ---- stage 4: 1x1 conv (BN4 scale folded) + bias.
    g = jnp.dot(g.astype(jnp.bfloat16), pwbd2_ref[...],
                preferred_element_type=jnp.float32)
    g = g + b4_ref[...]
    o_ref[...] = g.reshape(NB, H2, WC).astype(o_ref.dtype)


# ---------------------------------------------------------------------------
# Wrapper: NCHW in / NCHW out.  All layout plumbing (transpose, H pre-pad,
# (W,C) lane fusion, bf16 cast of the MXU operand) happens here.
# ---------------------------------------------------------------------------
def dwconv_block(x_nchw, kparams, size, nb):
    N, C, H, W = x_nchw.shape
    K = size
    WC = W * C
    assert K == 2 * PAD + 1, "fused kernel assumes the spatial-preserving case K == 2*pad+1"
    assert WC % 128 == 0, "fused-lane layout assumes W*C is a multiple of 128"
    assert N % nb == 0
    assert nb == 1 or H % 8 == 0, "batched-M merge needs H to be a multiple of 8"

    H1P = round_up(H + 2 * PAD, 8)       # stage-1/2 per-image row extent (pad ring kept)
    HIN = round_up(H1P + K - 1, 8)       # pre-padded per-image input rows

    (dwb1, pwbd1, dwb2, pwbd2, b1f, b2f, b3f, b4f, rowmask) = kparams

    # NCHW -> NHWC -> zero-pad H only (W padding lives in the banded weights) ->
    # fuse (W, C) into a 128-multiple lane axis -> bf16 MXU operand.
    x = jnp.transpose(x_nchw, (0, 2, 3, 1))
    x = jnp.pad(x, ((0, 0), (2 * PAD, HIN - H - 2 * PAD), (0, 0), (0, 0)))
    x = x.reshape(N, HIN, WC).astype(jnp.bfloat16)

    weights = [dwb1, pwbd1, dwb2, pwbd2, b1f, b2f, b3f, b4f, rowmask]

    def const_spec(a):
        nd = a.ndim
        return pl.BlockSpec(a.shape, lambda n, _nd=nd: (0,) * _nd)
    # TODO(synk): add pipeline_mode=pl.Buffered(1) to const_spec at production sizes so
    # these fetch-once weight blocks are not double-buffered (v7x VMEM saving).

    kernel = functools.partial(dwconv_block_kernel, K=K, NB=nb, H1P=H1P, H2=H, WC=WC)

    out = pl.pallas_call(
        kernel,
        out_shape=jax.ShapeDtypeStruct((N, H, WC), x_nchw.dtype),
        grid_spec=pltpu.PrefetchScalarGridSpec(
            num_scalar_prefetch=0,
            grid=(N // nb,),
            in_specs=[pl.BlockSpec((nb, HIN, WC), lambda n: (n, 0, 0))]
                     + [const_spec(w) for w in weights],
            out_specs=pl.BlockSpec((nb, H, WC), lambda n: (n, 0, 0)),
        ),
        compiler_params=pltpu.CompilerParams(
            dimension_semantics=("parallel",),   # grid steps independent (v7x 2-TC)
            vmem_limit_bytes=32 * 1024 * 1024),  # v5e default scoped VMEM is only 16 MiB
    )(x, *weights)

    # un-fuse the lane axis and go back to NCHW.
    return jnp.transpose(out.reshape(N, H, W, C), (0, 3, 1, 2))


def pick_nb(N):
    """Fold images into the matmul M dimension, but keep >= 2 grid steps (v7x 2 TCs)."""
    for nb in (8, 4, 2):
        if N % nb == 0 and N // nb >= 2:
            return nb
    return 1


# ---------------------------------------------------------------------------
# Wrapper-side weight preparation: fold BN scales, build the K-tap-stacked banded
# depthwise matrices (W padding encoded in the band) and block-diagonal pointwise
# matrices in the fused (W*C) lane layout, all as bf16 MXU operands.
# ---------------------------------------------------------------------------
def make_kernel_params(raw, H, W, C, K, nb):
    (dw1_w, pw1_w, dw2_w, pw2_w, bns) = raw

    def fold(p):
        gamma, beta, mean, var = p
        s = gamma / jnp.sqrt(var + BN_EPS)
        return s, beta - mean * s

    s1, b1 = fold(bns[0]); s2, b2 = fold(bns[1])
    s3, b3 = fold(bns[2]); s4, b4 = fold(bns[3])

    WC = W * C
    H1P = round_up(H + 2 * PAD, 8)

    # depthwise weights (C,1,K,K) -> (K,K,C), BN scale folded per channel.
    dw1 = jnp.transpose(dw1_w[:, 0], (1, 2, 0)) * s1[None, None, :]
    dw2 = jnp.transpose(dw2_w[:, 0], (1, 2, 0)) * s3[None, None, :]

    def banded_dw(dw_kkc):
        """B[dy, wi*C+ci, wo*C+co] = dw[dy, wi-wo+PAD, co] if ci==co and 0<=wi-wo+PAD<K
        else 0 (absent entries at the W boundaries implement the zero padding).
        Stacked over dy -> (K*W*C, W*C) so all K taps run as one matmul."""
        ii = jnp.arange(WC)
        jj = jnp.arange(WC)
        wi, ci = ii // C, ii % C
        wo, co = jj // C, jj % C
        dx = wi[:, None] - wo[None, :] + PAD
        valid = (ci[:, None] == co[None, :]) & (dx >= 0) & (dx < K)
        vals = dw_kkc[:, jnp.clip(dx, 0, K - 1), ci[:, None]]      # (K, WC, WC)
        band = jnp.where(valid[None], vals, 0.0)
        return band.reshape(K * WC, WC).astype(jnp.bfloat16)

    def block_diag_pw(pw_oi, scale):
        """BD[wi*C+ci, wo*C+co] = pw[co,ci]*scale[co] if wi==wo else 0."""
        pw_io = (pw_oi * scale[:, None]).T                          # (Cin, Cout)
        idx = jnp.arange(WC)
        same_w = (idx[:, None] // C) == (idx[None, :] // C)
        vals = pw_io[idx[:, None] % C, idx[None, :] % C]
        return jnp.where(same_w, vals, 0.0).astype(jnp.bfloat16)

    dwb1 = banded_dw(dw1)                                # (K*WC, WC) bf16
    dwb2 = banded_dw(dw2)                                # (K*WC, WC) bf16
    pwbd1 = block_diag_pw(pw1_w[:, :, 0, 0], s2)         # (WC, WC)  bf16
    pwbd2 = block_diag_pw(pw2_w[:, :, 0, 0], s4)         # (WC, WC)  bf16

    b1f = jnp.tile(b1, W)[None, :].astype(jnp.float32)   # (1, WC)
    b2f = jnp.tile(b2, W)[None, :].astype(jnp.float32)
    b3f = jnp.tile(b3, W)[None, :].astype(jnp.float32)
    b4f = jnp.tile(b4, W)[None, :].astype(jnp.float32)

    # rows-only 0/1 mask keeping the true H interior of each image's H1P extent.
    rows = jnp.arange(nb * H1P) % H1P
    rowmask = ((rows >= PAD) & (rows < PAD + H)).astype(jnp.float32)[:, None]

    return (dwb1, pwbd1, dwb2, pwbd2, b1f, b2f, b3f, b4f, rowmask)


# ---------------------------------------------------------------------------
# Pure-JAX NCHW reference (mirrors the PyTorch module exactly, f32).
# ---------------------------------------------------------------------------
def reference_nchw(x, raw, size, C):
    (dw1_w, pw1_w, dw2_w, pw2_w, bns) = raw

    def dwconv(x, w):  # w: (C, 1, K, K)
        return lax.conv_general_dilated(
            x, w, (1, 1), [(PAD, PAD), (PAD, PAD)],
            dimension_numbers=("NCHW", "OIHW", "NCHW"),
            feature_group_count=C)

    def pwconv(x, w):  # w: (C, C, 1, 1)
        return lax.conv_general_dilated(
            x, w, (1, 1), [(0, 0), (0, 0)],
            dimension_numbers=("NCHW", "OIHW", "NCHW"))

    def bn(x, p):
        gamma, beta, mean, var = p
        s = gamma / jnp.sqrt(var + BN_EPS)
        return (x - mean[None, :, None, None]) * s[None, :, None, None] \
            + beta[None, :, None, None]

    h = jnp.maximum(bn(dwconv(x, dw1_w), bns[0]), 0.0)
    h = bn(pwconv(h, pw1_w), bns[1])
    h = jnp.maximum(bn(dwconv(h, dw2_w), bns[2]), 0.0)
    h = bn(pwconv(h, pw2_w), bns[3])
    return h


def make_raw_params(key, C, K):
    keys = jax.random.split(key, 20)
    dw1_w = jax.random.normal(keys[0], (C, 1, K, K), jnp.float32) * 0.2
    pw1_w = jax.random.normal(keys[1], (C, C, 1, 1), jnp.float32) * 0.2
    dw2_w = jax.random.normal(keys[2], (C, 1, K, K), jnp.float32) * 0.2
    pw2_w = jax.random.normal(keys[3], (C, C, 1, 1), jnp.float32) * 0.2

    bns = []
    for i in range(4):
        gamma = 1.0 + 0.1 * jax.random.normal(keys[4 + 4 * i], (C,), jnp.float32)
        beta = 0.1 * jax.random.normal(keys[5 + 4 * i], (C,), jnp.float32)
        mean = 0.1 * jax.random.normal(keys[6 + 4 * i], (C,), jnp.float32)
        var = jnp.abs(jax.random.normal(keys[7 + 4 * i], (C,), jnp.float32)) + 0.5
        bns.append((gamma, beta, mean, var))

    return (dw1_w, pw1_w, dw2_w, pw2_w, bns)


if __name__ == "__main__":
    N, C, H, W = 2, 8, 16, 16
    K = 5  # YoloFastestV2 uses size=5, so padding=2 preserves the spatial size

    key = jax.random.PRNGKey(0)
    kx, kp = jax.random.split(key)
    x_nchw = jax.random.normal(kx, (N, C, H, W), jnp.float32)

    raw_params = make_raw_params(kp, C, K)
    nb = pick_nb(N)
    kernel_params = make_kernel_params(raw_params, H, W, C, K, nb)

    out_nchw = jax.block_until_ready(dwconv_block(x_nchw, kernel_params, K, nb))
    ref = jax.block_until_ready(reference_nchw(x_nchw, raw_params, K, C))

    assert out_nchw.shape == ref.shape, (out_nchw.shape, ref.shape)
    # bf16 MXU operands with f32 accumulation: bf16-appropriate tolerance vs f32 ref.
    err = float(jnp.max(jnp.abs(out_nchw - ref)))
    scale = float(jnp.max(jnp.abs(ref)))
    assert err <= 5e-2 + 5e-2 * scale, (err, scale)

    print("KERNEL_OK")
</pallas_src>

<mosaic_0001>
module attributes {stable_mosaic.version = 11 : i64} {
  func.func @dwconv_block_kernel(%arg0: i32, %arg1: memref<1x32x128xbf16, #tpu.memory_space<vmem>>, %arg2: memref<640x128xbf16, #tpu.memory_space<vmem>>, %arg3: memref<128x128xbf16, #tpu.memory_space<vmem>>, %arg4: memref<640x128xbf16, #tpu.memory_space<vmem>>, %arg5: memref<128x128xbf16, #tpu.memory_space<vmem>>, %arg6: memref<1x128xf32, #tpu.memory_space<vmem>>, %arg7: memref<1x128xf32, #tpu.memory_space<vmem>>, %arg8: memref<1x128xf32, #tpu.memory_space<vmem>>, %arg9: memref<1x128xf32, #tpu.memory_space<vmem>>, %arg10: memref<24x1xf32, #tpu.memory_space<vmem>>, %arg11: memref<1x16x128xf32, #tpu.memory_space<vmem>>) attributes {dimension_semantics = [#tpu.dimension_semantics<parallel>], iteration_bounds = array<i64: 2>, scalar_prefetch = 0 : i64, scratch_operands = 0 : i64, tpu.core_type = #tpu.core_type<tc>, window_params = [{transform_indices = @transform_0, window_bounds = array<i64: 1, 32, 128>}, {pipeline_mode = #tpu.pipeline_mode<synchronous>, transform_indices = @transform_1, window_bounds = array<i64: 640, 128>}, {pipeline_mode = #tpu.pipeline_mode<synchronous>, transform_indices = @transform_2, window_bounds = array<i64: 128, 128>}, {pipeline_mode = #tpu.pipeline_mode<synchronous>, transform_indices = @transform_3, window_bounds = array<i64: 640, 128>}, {pipeline_mode = #tpu.pipeline_mode<synchronous>, transform_indices = @transform_4, window_bounds = array<i64: 128, 128>}, {pipeline_mode = #tpu.pipeline_mode<synchronous>, transform_indices = @transform_5, window_bounds = array<i64: 1, 128>}, {pipeline_mode = #tpu.pipeline_mode<synchronous>, transform_indices = @transform_6, window_bounds = array<i64: 1, 128>}, {pipeline_mode = #tpu.pipeline_mode<synchronous>, transform_indices = @transform_7, window_bounds = array<i64: 1, 128>}, {pipeline_mode = #tpu.pipeline_mode<synchronous>, transform_indices = @transform_8, window_bounds = array<i64: 1, 128>}, {pipeline_mode = #tpu.pipeline_mode<synchronous>, transform_indices = @transform_9, window_bounds = array<i64: 24, 1>}, {transform_indices = @transform_10, window_bounds = array<i64: 1, 16, 128>}]} {
    %c0 = arith.constant 0 : index
    %c0_0 = arith.constant 0 : index
    %c0_1 = arith.constant 0 : index
    %0 = vector.load %arg1[%c0, %c0_0, %c0_1] : memref<1x32x128xbf16, #tpu.memory_space<vmem>>, vector<1x32x128xbf16>
    %1 = vector.extract_strided_slice %0 {offsets = [0, 0, 0], sizes = [1, 24, 128], strides = [1, 1, 1]} : vector<1x32x128xbf16> to vector<1x24x128xbf16>
    %2 = vector.extract_strided_slice %0 {offsets = [0, 1, 0], sizes = [1, 24, 128], strides = [1, 1, 1]} : vector<1x32x128xbf16> to vector<1x24x128xbf16>
    %3 = vector.extract_strided_slice %0 {offsets = [0, 2, 0], sizes = [1, 24, 128], strides = [1, 1, 1]} : vector<1x32x128xbf16> to vector<1x24x128xbf16>
    %4 = vector.extract_strided_slice %0 {offsets = [0, 3, 0], sizes = [1, 24, 128], strides = [1, 1, 1]} : vector<1x32x128xbf16> to vector<1x24x128xbf16>
    %5 = vector.extract_strided_slice %0 {offsets = [0, 4, 0], sizes = [1, 24, 128], strides = [1, 1, 1]} : vector<1x32x128xbf16> to vector<1x24x128xbf16>
    %6 = tpu.concatenate %1, %2, %3, %4, %5 in 2 : vector<1x24x128xbf16>, vector<1x24x128xbf16>, vector<1x24x128xbf16>, vector<1x24x128xbf16>, vector<1x24x128xbf16> -> vector<1x24x640xbf16>
    %7 = vector.shape_cast %6 : vector<1x24x640xbf16> to vector<24x640xbf16>
    %c0_2 = arith.constant 0 : index
    %c0_3 = arith.constant 0 : index
    %8 = vector.load %arg2[%c0_2, %c0_3] : memref<640x128xbf16, #tpu.memory_space<vmem>>, vector<640x128xbf16>
    %cst = arith.constant dense<0.000000e+00> : vector<24x128xf32>
    %9 = tpu.matmul %7, %8, %cst {dimension_numbers = #tpu.dot_dimension_numbers<[1], [0], [0], [1], [0, 0, 1, 1], [], []>} : vector<24x640xbf16>, vector<640x128xbf16>, vector<24x128xf32> -> vector<24x128xf32>
    %c0_4 = arith.constant 0 : index
    %c0_5 = arith.constant 0 : index
    %10 = vector.load %arg6[%c0_4, %c0_5] : memref<1x128xf32, #tpu.memory_space<vmem>>, vector<1x128xf32>
    %11 = vector.broadcast %10 : vector<1x128xf32> to vector<24x128xf32>
    %12 = arith.addf %9, %11 : vector<24x128xf32>
    %cst_6 = arith.constant 0.000000e+00 : f32
    %13 = vector.broadcast %cst_6 : f32 to vector<24x128xf32>
    %14 = arith.maximumf %12, %13 : vector<24x128xf32>
    %15 = arith.truncf %14 : vector<24x128xf32> to vector<24x128xbf16>
    %c0_7 = arith.constant 0 : index
    %c0_8 = arith.constant 0 : index
    %16 = vector.load %arg3[%c0_7, %c0_8] : memref<128x128xbf16, #tpu.memory_space<vmem>>, vector<128x128xbf16>
    %cst_9 = arith.constant dense<0.000000e+00> : vector<24x128xf32>
    %17 = tpu.matmul %15, %16, %cst_9 {dimension_numbers = #tpu.dot_dimension_numbers<[1], [0], [0], [1], [0, 0, 1, 1], [], []>} : vector<24x128xbf16>, vector<128x128xbf16>, vector<24x128xf32> -> vector<24x128xf32>
    %c0_10 = arith.constant 0 : index
    %c0_11 = arith.constant 0 : index
    %18 = vector.load %arg7[%c0_10, %c0_11] : memref<1x128xf32, #tpu.memory_space<vmem>>, vector<1x128xf32>
    %19 = vector.broadcast %18 : vector<1x128xf32> to vector<24x128xf32>
    %20 = arith.addf %17, %19 : vector<24x128xf32>
    %c0_12 = arith.constant 0 : index
    %c0_13 = arith.constant 0 : index
    %21 = vector.load %arg10[%c0_12, %c0_13] : memref<24x1xf32, #tpu.memory_space<vmem>>, vector<24x1xf32>
    %22 = vector.broadcast %21 : vector<24x1xf32> to vector<24x128xf32>
    %23 = arith.mulf %20, %22 : vector<24x128xf32>
    %24 = vector.shape_cast %23 : vector<24x128xf32> to vector<1x24x128xf32>
    %25 = arith.truncf %24 : vector<1x24x128xf32> to vector<1x24x128xbf16>
    %26 = vector.extract_strided_slice %25 {offsets = [0, 0, 0], sizes = [1, 16, 128], strides = [1, 1, 1]} : vector<1x24x128xbf16> to vector<1x16x128xbf16>
    %27 = vector.extract_strided_slice %25 {offsets = [0, 1, 0], sizes = [1, 16, 128], strides = [1, 1, 1]} : vector<1x24x128xbf16> to vector<1x16x128xbf16>
    %28 = vector.extract_strided_slice %25 {offsets = [0, 2, 0], sizes = [1, 16, 128], strides = [1, 1, 1]} : vector<1x24x128xbf16> to vector<1x16x128xbf16>
    %29 = vector.extract_strided_slice %25 {offsets = [0, 3, 0], sizes = [1, 16, 128], strides = [1, 1, 1]} : vector<1x24x128xbf16> to vector<1x16x128xbf16>
    %30 = vector.extract_strided_slice %25 {offsets = [0, 4, 0], sizes = [1, 16, 128], strides = [1, 1, 1]} : vector<1x24x128xbf16> to vector<1x16x128xbf16>
    %31 = tpu.concatenate %26, %27, %28, %29, %30 in 2 : vector<1x16x128xbf16>, vector<1x16x128xbf16>, vector<1x16x128xbf16>, vector<1x16x128xbf16>, vector<1x16x128xbf16> -> vector<1x16x640xbf16>
    %32 = vector.shape_cast %31 : vector<1x16x640xbf16> to vector<16x640xbf16>
    %c0_14 = arith.constant 0 : index
    %c0_15 = arith.constant 0 : index
    %33 = vector.load %arg4[%c0_14, %c0_15] : memref<640x128xbf16, #tpu.memory_space<vmem>>, vector<640x128xbf16>
    %cst_16 = arith.constant dense<0.000000e+00> : vector<16x128xf32>
    %34 = tpu.matmul %32, %33, %cst_16 {dimension_numbers = #tpu.dot_dimension_numbers<[1], [0], [0], [1], [0, 0, 1, 1], [], []>} : vector<16x640xbf16>, vector<640x128xbf16>, vector<16x128xf32> -> vector<16x128xf32>
    %c0_17 = arith.constant 0 : index
    %c0_18 = arith.constant 0 : index
    %35 = vector.load %arg8[%c0_17, %c0_18] : memref<1x128xf32, #tpu.memory_space<vmem>>, vector<1x128xf32>
    %36 = vector.broadcast %35 : vector<1x128xf32> to vector<16x128xf32>
    %37 = arith.addf %34, %36 : vector<16x128xf32>
    %cst_19 = arith.constant 0.000000e+00 : f32
    %38 = vector.broadcast %cst_19 : f32 to vector<16x128xf32>
    %39 = arith.maximumf %37, %38 : vector<16x128xf32>
    %40 = arith.truncf %39 : vector<16x128xf32> to vector<16x128xbf16>
    %c0_20 = arith.constant 0 : index
    %c0_21 = arith.constant 0 : index
    %41 = vector.load %arg5[%c0_20, %c0_21] : memref<128x128xbf16, #tpu.memory_space<vmem>>, vector<128x128xbf16>
    %cst_22 = arith.constant dense<0.000000e+00> : vector<16x128xf32>
    %42 = tpu.matmul %40, %41, %cst_22 {dimension_numbers = #tpu.dot_dimension_numbers<[1], [0], [0], [1], [0, 0, 1, 1], [], []>} : vector<16x128xbf16>, vector<128x128xbf16>, vector<16x128xf32> -> vector<16x128xf32>
    %c0_23 = arith.constant 0 : index
    %c0_24 = arith.constant 0 : index
    %43 = vector.load %arg9[%c0_23, %c0_24] : memref<1x128xf32, #tpu.memory_space<vmem>>, vector<1x128xf32>
    %44 = vector.broadcast %43 : vector<1x128xf32> to vector<16x128xf32>
    %45 = arith.addf %42, %44 : vector<16x128xf32>
    %46 = vector.shape_cast %45 : vector<16x128xf32> to vector<1x16x128xf32>
    %c0_25 = arith.constant 0 : index
    %c0_26 = arith.constant 0 : index
    %c0_27 = arith.constant 0 : index
    %47 = vector.load %arg11[%c0_25, %c0_26, %c0_27] : memref<1x16x128xf32, #tpu.memory_space<vmem>>, vector<1x16x128xf32>
    tpu.vector_store %arg11[%c0_25, %c0_26, %c0_27], %46 {strides = array<i32>} : memref<1x16x128xf32, #tpu.memory_space<vmem>>, vector<1x16x128xf32>,
    return
  }
  func.func @transform_0(%arg0: i32) -> (i32, i32, i32) {
    %c0_i32 = arith.constant 0 : i32
    %c0_i32_0 = arith.constant 0 : i32
    %c0_i32_1 = arith.constant 0 : i32
    return %arg0, %c0_i32, %c0_i32_0 : i32, i32, i32
  }
  func.func @transform_1(%arg0: i32) -> (i32, i32) {
    %c0_i32 = arith.constant 0 : i32
    %c0_i32_0 = arith.constant 0 : i32
    %c0_i32_1 = arith.constant 0 : i32
    return %c0_i32, %c0_i32_0 : i32, i32
  }
  func.func @transform_2(%arg0: i32) -> (i32, i32) {
    %c0_i32 = arith.constant 0 : i32
    %c0_i32_0 = arith.constant 0 : i32
    %c0_i32_1 = arith.constant 0 : i32
    return %c0_i32, %c0_i32_0 : i32, i32
  }
  func.func @transform_3(%arg0: i32) -> (i32, i32) {
    %c0_i32 = arith.constant 0 : i32
    %c0_i32_0 = arith.constant 0 : i32
    %c0_i32_1 = arith.constant 0 : i32
    return %c0_i32, %c0_i32_0 : i32, i32
  }
  func.func @transform_4(%arg0: i32) -> (i32, i32) {
    %c0_i32 = arith.constant 0 : i32
    %c0_i32_0 = arith.constant 0 : i32
    %c0_i32_1 = arith.constant 0 : i32
    return %c0_i32, %c0_i32_0 : i32, i32
  }
  func.func @transform_5(%arg0: i32) -> (i32, i32) {
    %c0_i32 = arith.constant 0 : i32
    %c0_i32_0 = arith.constant 0 : i32
    %c0_i32_1 = arith.constant 0 : i32
    return %c0_i32, %c0_i32_0 : i32, i32
  }
  func.func @transform_6(%arg0: i32) -> (i32, i32) {
    %c0_i32 = arith.constant 0 : i32
    %c0_i32_0 = arith.constant 0 : i32
    %c0_i32_1 = arith.constant 0 : i32
    return %c0_i32, %c0_i32_0 : i32, i32
  }
  func.func @transform_7(%arg0: i32) -> (i32, i32) {
    %c0_i32 = arith.constant 0 : i32
    %c0_i32_0 = arith.constant 0 : i32
    %c0_i32_1 = arith.constant 0 : i32
    return %c0_i32, %c0_i32_0 : i32, i32
  }
  func.func @transform_8(%arg0: i32) -> (i32, i32) {
    %c0_i32 = arith.constant 0 : i32
    %c0_i32_0 = arith.constant 0 : i32
    %c0_i32_1 = arith.constant 0 : i32
    return %c0_i32, %c0_i32_0 : i32, i32
  }
  func.func @transform_9(%arg0: i32) -> (i32, i32) {
    %c0_i32 = arith.constant 0 : i32
    %c0_i32_0 = arith.constant 0 : i32
    %c0_i32_1 = arith.constant 0 : i32
    return %c0_i32, %c0_i32_0 : i32, i32
  }
  func.func @transform_10(%arg0: i32) -> (i32, i32, i32) {
    %c0_i32 = arith.constant 0 : i32
    %c0_i32_0 = arith.constant 0 : i32
    %c0_i32_1 = arith.constant 0 : i32
    return %arg0, %c0_i32, %c0_i32_0 : i32, i32, i32
  }
}

</mosaic_0001>

<llo_original>
// kernel: tpu_custom_call.1
$region0: #{tpu_custom_call.1}
  #allocation0 [shape = 'u32[]', space=smem, size = 0x4, offset = 0x4, fixed_abs, tag = 'smem constant byte address 0x4 - core index']
  #allocation1 [shape = 'u32[144,128]{1,0:T(1,128)}', space=vmem, size = 0x12000, scoped, tag = 'internal scratch']
  %s0 = inlined_call_operand.hbm [shape: bf16[2,32,128], index: 0, kind: input, shape index: {}]
  %s1 = inlined_call_operand.hbm [shape: bf16[640,128], index: 1, kind: input, shape index: {}]
  %s2 = inlined_call_operand.hbm [shape: bf16[128,128], index: 2, kind: input, shape index: {}]
  %s3 = inlined_call_operand.hbm [shape: bf16[640,128], index: 3, kind: input, shape index: {}]
  %s4 = inlined_call_operand.hbm [shape: bf16[128,128], index: 4, kind: input, shape index: {}]
  %s5 = inlined_call_operand.vmem [shape: f32[1,128], index: 5, kind: input, shape index: {}]
  %s6 = inlined_call_operand.vmem [shape: f32[1,128], index: 6, kind: input, shape index: {}]
  %s7 = inlined_call_operand.vmem [shape: f32[1,128], index: 7, kind: input, shape index: {}]
  %s8 = inlined_call_operand.vmem [shape: f32[1,128], index: 8, kind: input, shape index: {}]
  %s9 = inlined_call_operand.vmem [shape: f32[24,1], index: 9, kind: input, shape index: {}]
  %s10 = inlined_call_operand.hbm [shape: f32[2,16,128], index: 10, kind: output, shape index: {}]
  %s11 = sld [smem:[#allocation0]]
  $region93: #{tpu_custom_call.1} parent=0
    _
  %s13 = ssub.s32 1, %s11
  %s14 = scalar_select 0, %s13, %s11
  $region1: #{tpu_custom_call.1} parent=0
    #allocation2 [shape = 'u8[16384]{0}', space=vmem, size = 0x4000, scoped, tag = 'input window, operand 0']
    #allocation3 [shape = 's32[2]{0}', space=sflag, size = 0x8, scoped, tag = 'scoped memory for tpu_custom_call.1']
    #allocation4 [shape = 's32[2]{0}', space=sflag, size = 0x8, scoped, tag = 'scoped memory for tpu_custom_call.1']
    #allocation5 [shape = 'u8[163840]{0}', space=vmem, size = 0x28000, scoped, tag = 'input window, operand 1, single buffered']
    #allocation6 [shape = 's32[1]{0}', space=sflag, size = 0x4, scoped, tag = 'scoped memory for tpu_custom_call.1']
    #allocation7 [shape = 'u8[32768]{0}', space=vmem, size = 0x8000, scoped, tag = 'input window, operand 2, single buffered']
    #allocation8 [shape = 'u8[163840]{0}', space=vmem, size = 0x28000, scoped, tag = 'input window, operand 3, single buffered']
    #allocation9 [shape = 's32[1]{0}', space=sflag, size = 0x4, scoped, tag = 'scoped memory for tpu_custom_call.1']
    #allocation10 [shape = 'u8[32768]{0}', space=vmem, size = 0x8000, scoped, tag = 'input window, operand 4, single buffered']
    #allocation11 [shape = 'u8[16384]{0}', space=vmem, size = 0x4000, scoped, tag = 'output window, operand 0']
    %15 = vsyncpa [#allocation3], 0
    %s16 = scalar_lea.sflag [#allocation3], 1
    %17 = vsyncpa %s16, 0
    %18 = vsyncpa [#allocation6], 0
    %19 = vsyncpa [#allocation9], 0
    %20 = vsyncpa [#allocation4], 0
    %s21 = scalar_lea.sflag [#allocation4], 1
    %22 = vsyncpa %s21, 0
    loop: start=0, step=1, limit=4
    $region2: #{tpu_custom_call.1} parent=1 // loop_pre_header
      _
    $region3: #{tpu_custom_call.1} parent=1 // loop_header
      %s24 = sphi 0, %s28
      %p25 = scmp.ge.s32.totalorder %s24, 4
      %s34 = sphi 0, %s36
      %s37 = sphi 0, %s34
      %s38 = sphi 0, %s37
      %s54 = sphi 0, %s38
      %s58 = sphi 0, %s58
      %s60 = sphi 0, %s58
      %s61 = sphi 0, %s60
      %s75 = sphi 0, %s61
      %s79 = sphi 0, %s79
      %s81 = sphi 0, %s79
      %s82 = sphi 0, %s81
      %s96 = sphi 0, %s82
      %s100 = sphi 0, %s100
      %s102 = sphi 0, %s100
      %s103 = sphi 0, %s102
      %s117 = sphi 0, %s103
      %s121 = sphi 0, %s121
      %s123 = sphi 0, %s121
      %s124 = sphi 0, %s123
      %s138 = sphi 0, %s124
      %s142 = sphi 0, %s142
      %s144 = sphi 0, %s142
      %s145 = sphi 0, %s144
      %s159 = sphi 0, %s145
      %s163 = sphi 0, %s163
      %s165 = sphi 0, %s163
      %s166 = sphi 0, %s165
      %s180 = sphi 0, %s166
      %s184 = sphi 0, %s184
      %s186 = sphi 0, %s184
      %s187 = sphi 0, %s186
      %s201 = sphi 0, %s187
      %s205 = sphi 0, %s205
      %s207 = sphi 0, %s205
      %s208 = sphi 0, %s207
      %s222 = sphi 0, %s208
      %s226 = sphi 0, %s226
      %s228 = sphi 0, %s226
      %s229 = sphi 0, %s228
      %s243 = sphi 0, %s229
      %s249 = sphi 0, %s251
      %s252 = sphi 0, %s249
      %s253 = sphi 0, %s252
      %s269 = sphi 0, %s253
    $region4: #{tpu_custom_call.1} parent=1 // loop_header_branch
      %27 = sbr.rel (%p25) target = $region8
    $region5: #{tpu_custom_call.1} parent=1 // loop_body
      %s29 = ssub.s32 %s24, 1
      %s30 = ssub.s32 %s24, 2
      %s31 = sadd.s32 %s24, 1
      %s32 = ssub.s32 %s24, %s31
      %p33 = scmp.eq.s32.totalorder %s32, 0
      %s35 = sadd.s32 %s34, 1
      %s36 = scalar_select %p33, %s34, %s35
      %p39 = pneg %p33
      %p40 = scmp.eq.s32.totalorder %s24, 1
      %p41 = por %p39, %p40
      %p42 = scmp.ne.s32.totalorder %s34, %s37
      %p43 = scmp.eq.s32.totalorder %s24, 0
      %p44 = por %p42, %p43
      %p45 = scmp.ne.s32.totalorder %s34, %s37
      %p46 = scmp.eq.s32.totalorder %s29, 1
      %p47 = por %p45, %p46
      %p48 = scmp.ne.s32.totalorder %s37, %s38
      %p49 = scmp.eq.s32.totalorder %s29, 0
      %p50 = por %p48, %p49
      %p51 = scmp.ne.s32.totalorder %s37, %s38
      %p52 = scmp.eq.s32.totalorder %s30, 1
      %p53 = por %p51, %p52
      %p55 = scmp.ne.s32.totalorder %s38, %s54
      %p56 = scmp.eq.s32.totalorder %s30, 0
      %p57 = por %p55, %p56
      %s59 = sadd.s32 %s58, 1
      %p62 = scmp.eq.s32.totalorder %s24, 1
      %p63 = scmp.ne.s32.totalorder %s58, %s60
      %p64 = scmp.eq.s32.totalorder %s24, 0
      %p65 = por %p63, %p64
      %p66 = scmp.ne.s32.totalorder %s58, %s60
      %p67 = scmp.eq.s32.totalorder %s29, 1
      %p68 = por %p66, %p67
      %p69 = scmp.ne.s32.totalorder %s60, %s61
      %p70 = scmp.eq.s32.totalorder %s29, 0
      %p71 = por %p69, %p70
      %p72 = scmp.ne.s32.totalorder %s60, %s61
      %p73 = scmp.eq.s32.totalorder %s30, 1
      %p74 = por %p72, %p73
      %p76 = scmp.ne.s32.totalorder %s61, %s75
      %p77 = scmp.eq.s32.totalorder %s30, 0
      %p78 = por %p76, %p77
      %s80 = sadd.s32 %s79, 1
      %p83 = scmp.eq.s32.totalorder %s24, 1
      %p84 = scmp.ne.s32.totalorder %s79, %s81
      %p85 = scmp.eq.s32.totalorder %s24, 0
      %p86 = por %p84, %p85
      %p87 = scmp.ne.s32.totalorder %s79, %s81
      %p88 = scmp.eq.s32.totalorder %s29, 1
      %p89 = por %p87, %p88
      %p90 = scmp.ne.s32.totalorder %s81, %s82
      %p91 = scmp.eq.s32.totalorder %s29, 0
      %p92 = por %p90, %p91
      %p93 = scmp.ne.s32.totalorder %s81, %s82
      %p94 = scmp.eq.s32.totalorder %s30, 1
      %p95 = por %p93, %p94
      %p97 = scmp.ne.s32.totalorder %s82, %s96
      %p98 = scmp.eq.s32.totalorder %s30, 0
      %p99 = por %p97, %p98
      %s101 = sadd.s32 %s100, 1
      %p104 = scmp.eq.s32.totalorder %s24, 1
      %p105 = scmp.ne.s32.totalorder %s100, %s102
      %p106 = scmp.eq.s32.totalorder %s24, 0
      %p107 = por %p105, %p106
      %p108 = scmp.ne.s32.totalorder %s100, %s102
      %p109 = scmp.eq.s32.totalorder %s29, 1
      %p110 = por %p108, %p109
      %p111 = scmp.ne.s32.totalorder %s102, %s103
      %p112 = scmp.eq.s32.totalorder %s29, 0
      %p113 = por %p111, %p112
      %p114 = scmp.ne.s32.totalorder %s102, %s103
      %p115 = scmp.eq.s32.totalorder %s30, 1
      %p116 = por %p114, %p115
      %p118 = scmp.ne.s32.totalorder %s103, %s117
      %p119 = scmp.eq.s32.totalorder %s30, 0
      %p120 = por %p118, %p119
      %s122 = sadd.s32 %s121, 1
      %p125 = scmp.eq.s32.totalorder %s24, 1
      %p126 = scmp.ne.s32.totalorder %s121, %s123
      %p127 = scmp.eq.s32.totalorder %s24, 0
      %p128 = por %p126, %p127
      %p129 = scmp.ne.s32.totalorder %s121, %s123
      %p130 = scmp.eq.s32.totalorder %s29, 1
      %p131 = por %p129, %p130
      %p132 = scmp.ne.s32.totalorder %s123, %s124
      %p133 = scmp.eq.s32.totalorder %s29, 0
      %p134 = por %p132, %p133
      %p135 = scmp.ne.s32.totalorder %s123, %s124
      %p136 = scmp.eq.s32.totalorder %s30, 1
      %p137 = por %p135, %p136
      %p139 = scmp.ne.s32.totalorder %s124, %s138
      %p140 = scmp.eq.s32.totalorder %s30, 0
      %p141 = por %p139, %p140
      %s143 = sadd.s32 %s142, 1
      %p146 = scmp.eq.s32.totalorder %s24, 1
      %p147 = scmp.ne.s32.totalorder %s142, %s144
      %p148 = scmp.eq.s32.totalorder %s24, 0
      %p149 = por %p147, %p148
      %p150 = scmp.ne.s32.totalorder %s142, %s144
      %p151 = scmp.eq.s32.totalorder %s29, 1
      %p152 = por %p150, %p151
      %p153 = scmp.ne.s32.totalorder %s144, %s145
      %p154 = scmp.eq.s32.totalorder %s29, 0
      %p155 = por %p153, %p154
      %p156 = scmp.ne.s32.totalorder %s144, %s145
      %p157 = scmp.eq.s32.totalorder %s30, 1
      %p158 = por %p156, %p157
      %p160 = scmp.ne.s32.totalorder %s145, %s159
      %p161 = scmp.eq.s32.totalorder %s30, 0
      %p162 = por %p160, %p161
      %s164 = sadd.s32 %s163, 1
      %p167 = scmp.eq.s32.totalorder %s24, 1
      %p168 = scmp.ne.s32.totalorder %s163, %s165
      %p169 = scmp.eq.s32.totalorder %s24, 0
      %p170 = por %p168, %p169
      %p171 = scmp.ne.s32.totalorder %s163, %s165
      %p172 = scmp.eq.s32.totalorder %s29, 1
      %p173 = por %p171, %p172
      %p174 = scmp.ne.s32.totalorder %s165, %s166
      %p175 = scmp.eq.s32.totalorder %s29, 0
      %p176 = por %p174, %p175
      %p177 = scmp.ne.s32.totalorder %s165, %s166
      %p178 = scmp.eq.s32.totalorder %s30, 1
      %p179 = por %p177, %p178
      %p181 = scmp.ne.s32.totalorder %s166, %s180
      %p182 = scmp.eq.s32.totalorder %s30, 0
      %p183 = por %p181, %p182
      %s185 = sadd.s32 %s184, 1
      %p188 = scmp.eq.s32.totalorder %s24, 1
      %p189 = scmp.ne.s32.totalorder %s184, %s186
      %p190 = scmp.eq.s32.totalorder %s24, 0
      %p191 = por %p189, %p190
      %p192 = scmp.ne.s32.totalorder %s184, %s186
      %p193 = scmp.eq.s32.totalorder %s29, 1
      %p194 = por %p192, %p193
      %p195 = scmp.ne.s32.totalorder %s186, %s187
      %p196 = scmp.eq.s32.totalorder %s29, 0
      %p197 = por %p195, %p196
      %p198 = scmp.ne.s32.totalorder %s186, %s187
      %p199 = scmp.eq.s32.totalorder %s30, 1
      %p200 = por %p198, %p199
      %p202 = scmp.ne.s32.totalorder %s187, %s201
      %p203 = scmp.eq.s32.totalorder %s30, 0
      %p204 = por %p202, %p203
      %s206 = sadd.s32 %s205, 1
      %p209 = scmp.eq.s32.totalorder %s24, 1
      %p210 = scmp.ne.s32.totalorder %s205, %s207
      %p211 = scmp.eq.s32.totalorder %s24, 0
      %p212 = por %p210, %p211
      %p213 = scmp.ne.s32.totalorder %s205, %s207
      %p214 = scmp.eq.s32.totalorder %s29, 1
      %p215 = por %p213, %p214
      %p216 = scmp.ne.s32.totalorder %s207, %s208
      %p217 = scmp.eq.s32.totalorder %s29, 0
      %p218 = por %p216, %p217
      %p219 = scmp.ne.s32.totalorder %s207, %s208
      %p220 = scmp.eq.s32.totalorder %s30, 1
      %p221 = por %p219, %p220
      %p223 = scmp.ne.s32.totalorder %s208, %s222
      %p224 = scmp.eq.s32.totalorder %s30, 0
      %p225 = por %p223, %p224
      %s227 = sadd.s32 %s226, 1
      %p230 = scmp.eq.s32.totalorder %s24, 1
      %p231 = scmp.ne.s32.totalorder %s226, %s228
      %p232 = scmp.eq.s32.totalorder %s24, 0
      %p233 = por %p231, %p232
      %p234 = scmp.ne.s32.totalorder %s226, %s228
      %p235 = scmp.eq.s32.totalorder %s29, 1
      %p236 = por %p234, %p235
      %p237 = scmp.ne.s32.totalorder %s228, %s229
      %p238 = scmp.eq.s32.totalorder %s29, 0
      %p239 = por %p237, %p238
      %p240 = scmp.ne.s32.totalorder %s228, %s229
      %p241 = scmp.eq.s32.totalorder %s30, 1
      %p242 = por %p240, %p241
      %p244 = scmp.ne.s32.totalorder %s229, %s243
      %p245 = scmp.eq.s32.totalorder %s30, 0
      %p246 = por %p244, %p245
      %s247 = ssub.s32 %s24, %s31
      %p248 = scmp.eq.s32.totalorder %s247, 0
      %s250 = sadd.s32 %s249, 1
      %s251 = scalar_select %p248, %s249, %s250
      %p254 = pneg %p248
      %p255 = scmp.eq.s32.totalorder %s24, 1
      %p256 = por %p254, %p255
      %p257 = scmp.ne.s32.totalorder %s249, %s252
      %p258 = scmp.eq.s32.totalorder %s24, 0
      %p259 = por %p257, %p258
      %p260 = scmp.ne.s32.totalorder %s249, %s252
      %p261 = scmp.eq.s32.totalorder %s29, 1
      %p262 = por %p260, %p261
      %p263 = scmp.ne.s32.totalorder %s252, %s253
      %p264 = scmp.eq.s32.totalorder %s29, 0
      %p265 = por %p263, %p264
      %p266 = scmp.ne.s32.totalorder %s252, %s253
      %p267 = scmp.eq.s32.totalorder %s30, 1
      %p268 = por %p266, %p267
      %p270 = scmp.ne.s32.totalorder %s253, %s269
      %p271 = scmp.eq.s32.totalorder %s30, 0
      %p272 = por %p270, %p271
      %p273 = scmp.le.s32.totalorder 1, %s24
      %p274 = scmp.lt.s32.totalorder %s24, 3
      %p275 = pnand %p273, %p274
      %p276 = pneg %p275
      // Predicated region
      $region9: #{tpu_custom_call.1} parent=5 // pred_check
        _
      $region10: #{tpu_custom_call.1} parent=5 // pred_check_branch
        %278 = sbr.rel (%p275) target = $region12
      $region11: #{tpu_custom_call.1} parent=5 // pred_region
        %s279 = ssub.s32 %s24, 1
        // Predicated region
        $region13: #{tpu_custom_call.1} parent=11 // pred_check
          %p280 = pneg %p71
        $region14: #{tpu_custom_call.1} parent=11 // pred_check_branch
          %282 = sbr.rel (%p280) target = $region16
        $region15: #{tpu_custom_call.1} parent=11 // pred_region
          %s284 = ssub.s32 5120, 5120
          %285 = vsyncadd [#allocation6], %s284
          %s286 = sshll.u32 [#allocation5], 4
          %s287 = int_to_ptr.vmem [resolvable:$true] %s286
          %292 = dma.hbm_to_vmem [thread:$0]  %s1, 5120, %s287, [#allocation6], 64, 64, 4
        $region16: #{tpu_custom_call.1} parent=11 // pred_fallthru
          _
        // Predicated region
        $region17: #{tpu_custom_call.1} parent=11 // pred_check
          %p293 = pneg %p92
        $region18: #{tpu_custom_call.1} parent=11 // pred_check_branch
          %295 = sbr.rel (%p293) target = $region20
        $region19: #{tpu_custom_call.1} parent=11 // pred_region
          %s297 = ssub.s32 1024, 1024
          %298 = vsyncadd [#allocation6], %s297
          %s299 = sshll.u32 [#allocation7], 4
          %s300 = int_to_ptr.vmem [resolvable:$true] %s299
          %305 = dma.hbm_to_vmem [thread:$0]  %s2, 1024, %s300, [#allocation6], 64, 64, 4
        $region20: #{tpu_custom_call.1} parent=11 // pred_fallthru
          _
        // Predicated region
        $region21: #{tpu_custom_call.1} parent=11 // pred_check
          %p306 = pneg %p113
        $region22: #{tpu_custom_call.1} parent=11 // pred_check_branch
          %308 = sbr.rel (%p306) target = $region24
        $region23: #{tpu_custom_call.1} parent=11 // pred_region
          %s310 = ssub.s32 5120, 5120
          %311 = vsyncadd [#allocation9], %s310
          %s312 = sshll.u32 [#allocation8], 4
          %s313 = int_to_ptr.vmem [resolvable:$true] %s312
          %318 = dma.hbm_to_vmem [thread:$0]  %s3, 5120, %s313, [#allocation9], 64, 64, 4
        $region24: #{tpu_custom_call.1} parent=11 // pred_fallthru
          _
        // Predicated region
        $region25: #{tpu_custom_call.1} parent=11 // pred_check
          %p319 = pneg %p134
        $region26: #{tpu_custom_call.1} parent=11 // pred_check_branch
          %321 = sbr.rel (%p319) target = $region28
        $region27: #{tpu_custom_call.1} parent=11 // pred_region
          %s323 = ssub.s32 1024, 1024
          %324 = vsyncadd [#allocation9], %s323
          %s325 = sshll.u32 [#allocation10], 4
          %s326 = int_to_ptr.vmem [resolvable:$true] %s325
          %331 = dma.hbm_to_vmem [thread:$0]  %s4, 1024, %s326, [#allocation9], 64, 64, 4
        $region28: #{tpu_custom_call.1} parent=11 // pred_fallthru
          _
        // Predicated region
        $region29: #{tpu_custom_call.1} parent=11 // pred_check
          %p332 = pneg %p155
        $region30: #{tpu_custom_call.1} parent=11 // pred_check_branch
          %334 = sbr.rel (%p332) target = $region32
        $region31: #{tpu_custom_call.1} parent=11 // pred_region
          _
        $region32: #{tpu_custom_call.1} parent=11 // pred_fallthru
          _
        // Predicated region
        $region33: #{tpu_custom_call.1} parent=11 // pred_check
          %p335 = pneg %p176
        $region34: #{tpu_custom_call.1} parent=11 // pred_check_branch
          %337 = sbr.rel (%p335) target = $region36
        $region35: #{tpu_custom_call.1} parent=11 // pred_region
          _
        $region36: #{tpu_custom_call.1} parent=11 // pred_fallthru
          _
        // Predicated region
        $region37: #{tpu_custom_call.1} parent=11 // pred_check
          %p338 = pneg %p197
        $region38: #{tpu_custom_call.1} parent=11 // pred_check_branch
          %340 = sbr.rel (%p338) target = $region40
        $region39: #{tpu_custom_call.1} parent=11 // pred_region
          _
        $region40: #{tpu_custom_call.1} parent=11 // pred_fallthru
          _
        // Predicated region
        $region41: #{tpu_custom_call.1} parent=11 // pred_check
          %p341 = pneg %p218
        $region42: #{tpu_custom_call.1} parent=11 // pred_check_branch
          %343 = sbr.rel (%p341) target = $region44
        $region43: #{tpu_custom_call.1} parent=11 // pred_region
          _
        $region44: #{tpu_custom_call.1} parent=11 // pred_fallthru
          _
        // Predicated region
        $region45: #{tpu_custom_call.1} parent=11 // pred_check
          %p344 = pneg %p239
        $region46: #{tpu_custom_call.1} parent=11 // pred_check_branch
          %346 = sbr.rel (%p344) target = $region48
        $region47: #{tpu_custom_call.1} parent=11 // pred_region
          _
        $region48: #{tpu_custom_call.1} parent=11 // pred_fallthru
          _
      $region12: #{tpu_custom_call.1} parent=5 // pred_fallthru
        _
      %p347 = scmp.lt.s32.totalorder %s24, 2
      // Predicated region
      $region49: #{tpu_custom_call.1} parent=5 // pred_check
        %p348 = pneg %p347
      $region50: #{tpu_custom_call.1} parent=5 // pred_check_branch
        %350 = sbr.rel (%p348) target = $region52
      $region51: #{tpu_custom_call.1} parent=5 // pred_region
        // Predicated region
        $region53: #{tpu_custom_call.1} parent=51 // pred_check
          %p351 = pneg %p44
        $region54: #{tpu_custom_call.1} parent=51 // pred_check_branch
          %353 = sbr.rel (%p351) target = $region56
        $region55: #{tpu_custom_call.1} parent=51 // pred_region
          %s354 = sand.u32 %s34, 1
          %s355 = scalar_lea.sflag [#allocation3], %s354
          %s356 = sand.u32 %s34, 1
          %s357 = smul.addr %s356, 16
          %s358 = scalar_lea.vmem [#allocation2], %s357
          %s360 = ssub.s32 256, 256
          %361 = vsyncadd %s355, %s360
          %s362 = smul.addr %s24, 4
          %s363 = smul.addr %s362, 64
          %s364 = scalar_lea.hbm %s0, %s363
          %s365 = sshll.u32 %s358, 4
          %s366 = int_to_ptr.vmem [resolvable:$true] %s365
          %371 = dma.hbm_to_vmem [thread:$0]  %s364, 256, %s366, %s355, 64, 64, 4
        $region56: #{tpu_custom_call.1} parent=51 // pred_fallthru
          _
      $region52: #{tpu_custom_call.1} parent=5 // pred_fallthru
        _
      %p372 = scmp.le.s32.totalorder 1, %s24
      %p373 = scmp.lt.s32.totalorder %s24, 3
      %p374 = pnand %p372, %p373
      %p375 = pneg %p374
      // Predicated region
      $region57: #{tpu_custom_call.1} parent=5 // pred_check
        _
      $region58: #{tpu_custom_call.1} parent=5 // pred_check_branch
        %377 = sbr.rel (%p374) target = $region60
      $region59: #{tpu_custom_call.1} parent=5 // pred_region
        %s378 = ssub.s32 %s24, 1
        %s379 = sand.u32 %s37, 1
        %s380 = scalar_lea.sflag [#allocation3], %s379
        %s381 = sand.u32 %s37, 1
        %s382 = smul.addr %s381, 16
        %s383 = scalar_lea.vmem [#allocation2], %s382
        // Predicated region
        $region61: #{tpu_custom_call.1} parent=59 // pred_check
          %p384 = pneg %p50
        $region62: #{tpu_custom_call.1} parent=59 // pred_check_branch
          %386 = sbr.rel (%p384) target = $region64
        $region63: #{tpu_custom_call.1} parent=59 // pred_region
          %387 = dma.done %s380, 256
        $region64: #{tpu_custom_call.1} parent=59 // pred_fallthru
          _
        // Predicated region
        $region65: #{tpu_custom_call.1} parent=59 // pred_check
          %p388 = pneg %p71
        $region66: #{tpu_custom_call.1} parent=59 // pred_check_branch
          %390 = sbr.rel (%p388) target = $region68
        $region67: #{tpu_custom_call.1} parent=59 // pred_region
          %391 = dma.done [#allocation6], 5120
        $region68: #{tpu_custom_call.1} parent=59 // pred_fallthru
          _
        // Predicated region
        $region69: #{tpu_custom_call.1} parent=59 // pred_check
          %p392 = pneg %p92
        $region70: #{tpu_custom_call.1} parent=59 // pred_check_branch
          %394 = sbr.rel (%p392) target = $region72
        $region71: #{tpu_custom_call.1} parent=59 // pred_region
          %395 = dma.done [#allocation6], 1024
        $region72: #{tpu_custom_call.1} parent=59 // pred_fallthru
          _
        // Predicated region
        $region73: #{tpu_custom_call.1} parent=59 // pred_check
          %p396 = pneg %p113
        $region74: #{tpu_custom_call.1} parent=59 // pred_check_branch
          %398 = sbr.rel (%p396) target = $region76
        $region75: #{tpu_custom_call.1} parent=59 // pred_region
          %399 = dma.done [#allocation9], 5120
        $region76: #{tpu_custom_call.1} parent=59 // pred_fallthru
          _
        // Predicated region
        $region77: #{tpu_custom_call.1} parent=59 // pred_check
          %p400 = pneg %p134
        $region78: #{tpu_custom_call.1} parent=59 // pred_check_branch
          %402 = sbr.rel (%p400) target = $region80
        $region79: #{tpu_custom_call.1} parent=59 // pred_region
          %403 = dma.done [#allocation9], 1024
        $region80: #{tpu_custom_call.1} parent=59 // pred_fallthru
          _
        %s404 = sand.u32 %s37, 1
        %s405 = scalar_lea.sflag [#allocation3], %s404
        %s406 = sand.u32 %s37, 1
        %s407 = smul.addr %s406, 16
        %s408 = scalar_lea.vmem [#allocation2], %s407
        %p409 = pneg %p50
        %p410 = pneg %p47
        %p411 = pneg %p71
        %p412 = pneg %p68
        %p413 = pneg %p92
        %p414 = pneg %p89
        %p415 = pneg %p113
        %p416 = pneg %p110
        %p417 = pneg %p134
        %p418 = pneg %p131
        %p419 = pneg %p155
        %p420 = pneg %p152
        %p421 = pneg %p176
        %p422 = pneg %p173
        %p423 = pneg %p197
        %p424 = pneg %p194
        %p425 = pneg %p218
        %p426 = pneg %p215
        %p427 = pneg %p239
        %p428 = pneg %p236
        %p429 = pneg %p265
        %p430 = pneg %p262
        %s431 = sand.u32 %s252, 1
        %s432 = scalar_lea.sflag [#allocation4], %s431
        %s433 = sand.u32 %s252, 1
        %s434 = smul.addr %s433, 16
        %s435 = scalar_lea.vmem [#allocation11], %s434
        %v437 = vld [vmem:[%s383] sm:$0xf]
        %v438 = vld [vmem:[%s383 + $0x4] sm:$0xf]
        %v439 = vld [vmem:[%s383 + $0x8] sm:$0xf]
        %v440 = vld [vmem:[%s383 + $0xc] sm:$0xf]
        %v444 = vunpack.c.l.b16 %v437
        %v445 = vunpack.c.l.b16 %v438
        %v446 = vunpack.c.l.b16 %v439
        %v447 = vpack.c.b16 %v445, %v444
        %v448 = vpack.c.b16 %v446, %v446
        %v452 = vunpack.c.l.b16 %v440
        %v453 = vpack.c.b16 %v452, %v446
        %vm454 = vsmask.f32 7424
        %v456 = vshrl.u32 %v447, 16
        %v458 = vshll.u32 %v447, 16
        %v460 = vrot.slane %v458, 1
        %v461 = vor.u32 %v456, %v460
        %v463 = vshll.u32 %v453, 16
        %v465 = vrot.slane %v463, 1
        %v466 = vsel %vm454, %v461, %v465
        %v467 = vshrl.u32 %v453, 16
        %v469 = vor.u32 %v467, %v465
        %vm472 = vcmask 1046528
        %v473 = vrot.slane %v447, 1
        %v474 = vrot.slane %v453, 1
        %v475 = vsel %vm472, %v473, %v474
        %vm478 = vsmask.f32 6400
        %v479 = vrot.slane %v456, 1
        %v480 = vrot.slane %v458, 2
        %v481 = vor.u32 %v479, %v480
        %v482 = vrot.slane %v467, 1
        %v483 = vrot.slane %v463, 2
        %v484 = vor.u32 %v482, %v483
        %v485 = vsel %vm478, %v481, %v484
        %vm488 = vcmask 1045504
        %v489 = vrot.slane %v447, 2
        %v490 = vrot.slane %v453, 2
        %v491 = vsel %vm488, %v489, %v490
        %v494 = vld [vmem:[#allocation5] sm:$0xf]
        %v495 = vld [vmem:[#allocation5 + $0x4] sm:$0xf]
        %v496 = vld [vmem:[#allocation5 + $0x8] sm:$0xf]
        %v497 = vld [vmem:[#allocation5 + $0xc] sm:$0xf]
        %v498 = vld [vmem:[#allocation5 + $0x10] sm:$0xf]
        %v499 = vld [vmem:[#allocation5 + $0x14] sm:$0xf]
        %v500 = vld [vmem:[#allocation5 + $0x18] sm:$0xf]
        %v501 = vld [vmem:[#allocation5 + $0x1c] sm:$0xf]
        %v502 = vld [vmem:[#allocation5 + $0x20] sm:$0xf]
        %v503 = vld [vmem:[#allocation5 + $0x24] sm:$0xf]
        %v504 = vld [vmem:[#allocation5 + $0x28] sm:$0xf]
        %v505 = vld [vmem:[#allocation5 + $0x2c] sm:$0xf]
        %v506 = vld [vmem:[#allocation5 + $0x30] sm:$0xf]
        %v507 = vld [vmem:[#allocation5 + $0x34] sm:$0xf]
        %v508 = vld [vmem:[#allocation5 + $0x38] sm:$0xf]
        %v509 = vld [vmem:[#allocation5 + $0x3c] sm:$0xf]
        %v510 = vld [vmem:[#allocation5 + $0x40] sm:$0xf]
        %v511 = vld [vmem:[#allocation5 + $0x44] sm:$0xf]
        %v512 = vld [vmem:[#allocation5 + $0x48] sm:$0xf]
        %v513 = vld [vmem:[#allocation5 + $0x4c] sm:$0xf]
        %v514 = vld [vmem:[#allocation5 + $0x50] sm:$0xf]
        %v515 = vld [vmem:[#allocation5 + $0x54] sm:$0xf]
        %v516 = vld [vmem:[#allocation5 + $0x58] sm:$0xf]
        %v517 = vld [vmem:[#allocation5 + $0x5c] sm:$0xf]
        %v518 = vld [vmem:[#allocation5 + $0x60] sm:$0xf]
        %v519 = vld [vmem:[#allocation5 + $0x64] sm:$0xf]
        %v520 = vld [vmem:[#allocation5 + $0x68] sm:$0xf]
        %v521 = vld [vmem:[#allocation5 + $0x6c] sm:$0xf]
        %v522 = vld [vmem:[#allocation5 + $0x70] sm:$0xf]
        %v523 = vld [vmem:[#allocation5 + $0x74] sm:$0xf]
        %v524 = vld [vmem:[#allocation5 + $0x78] sm:$0xf]
        %v525 = vld [vmem:[#allocation5 + $0x7c] sm:$0xf]
        %v526 = vld [vmem:[#allocation5 + $0x80] sm:$0xf]
        %v527 = vld [vmem:[#allocation5 + $0x84] sm:$0xf]
        %v528 = vld [vmem:[#allocation5 + $0x88] sm:$0xf]
        %v529 = vld [vmem:[#allocation5 + $0x8c] sm:$0xf]
        %v530 = vld [vmem:[#allocation5 + $0x90] sm:$0xf]
        %v531 = vld [vmem:[#allocation5 + $0x94] sm:$0xf]
        %v532 = vld [vmem:[#allocation5 + $0x98] sm:$0xf]
        %v533 = vld [vmem:[#allocation5 + $0x9c] sm:$0xf]
        %v534 = vld [vmem:[#allocation5 + $0xa0] sm:$0xf]
        %v535 = vld [vmem:[#allocation5 + $0xa4] sm:$0xf]
        %v536 = vld [vmem:[#allocation5 + $0xa8] sm:$0xf]
        %v537 = vld [vmem:[#allocation5 + $0xac] sm:$0xf]
        %v538 = vld [vmem:[#allocation5 + $0xb0] sm:$0xf]
        %v539 = vld [vmem:[#allocation5 + $0xb4] sm:$0xf]
        %v540 = vld [vmem:[#allocation5 + $0xb8] sm:$0xf]
        %v541 = vld [vmem:[#allocation5 + $0xbc] sm:$0xf]
        %v542 = vld [vmem:[#allocation5 + $0xc0] sm:$0xf]
        %v543 = vld [vmem:[#allocation5 + $0xc4] sm:$0xf]
        %v544 = vld [vmem:[#allocation5 + $0xc8] sm:$0xf]
        %v545 = vld [vmem:[#allocation5 + $0xcc] sm:$0xf]
        %v546 = vld [vmem:[#allocation5 + $0xd0] sm:$0xf]
        %v547 = vld [vmem:[#allocation5 + $0xd4] sm:$0xf]
        %v548 = vld [vmem:[#allocation5 + $0xd8] sm:$0xf]
        %v549 = vld [vmem:[#allocation5 + $0xdc] sm:$0xf]
        %v550 = vld [vmem:[#allocation5 + $0xe0] sm:$0xf]
        %v551 = vld [vmem:[#allocation5 + $0xe4] sm:$0xf]
        %v552 = vld [vmem:[#allocation5 + $0xe8] sm:$0xf]
        %v553 = vld [vmem:[#allocation5 + $0xec] sm:$0xf]
        %v554 = vld [vmem:[#allocation5 + $0xf0] sm:$0xf]
        %v555 = vld [vmem:[#allocation5 + $0xf4] sm:$0xf]
        %v556 = vld [vmem:[#allocation5 + $0xf8] sm:$0xf]
        %v557 = vld [vmem:[#allocation5 + $0xfc] sm:$0xf]
        %v558 = vld [vmem:[#allocation5 + $0x100] sm:$0xf]
        %v559 = vld [vmem:[#allocation5 + $0x104] sm:$0xf]
        %v560 = vld [vmem:[#allocation5 + $0x108] sm:$0xf]
        %v561 = vld [vmem:[#allocation5 + $0x10c] sm:$0xf]
        %v562 = vld [vmem:[#allocation5 + $0x110] sm:$0xf]
        %v563 = vld [vmem:[#allocation5 + $0x114] sm:$0xf]
        %v564 = vld [vmem:[#allocation5 + $0x118] sm:$0xf]
        %v565 = vld [vmem:[#allocation5 + $0x11c] sm:$0xf]
        %v566 = vld [vmem:[#allocation5 + $0x120] sm:$0xf]
        %v567 = vld [vmem:[#allocation5 + $0x124] sm:$0xf]
        %v568 = vld [vmem:[#allocation5 + $0x128] sm:$0xf]
        %v569 = vld [vmem:[#allocation5 + $0x12c] sm:$0xf]
        %v570 = vld [vmem:[#allocation5 + $0x130] sm:$0xf]
        %v571 = vld [vmem:[#allocation5 + $0x134] sm:$0xf]
        %v572 = vld [vmem:[#allocation5 + $0x138] sm:$0xf]
        %v573 = vld [vmem:[#allocation5 + $0x13c] sm:$0xf]
        %v574 = vld [vmem:[%s5] sm:$0x1]
        %v576 = vlaneseq
        %v577 = vshrl.u32 %v576, 7
        %v578 = vsub.s32 0, %v577
        %v579 = vrot.slane %v574, %v578
        %v661 = vunpack.c.l.b16 %v494
        %v662 = vunpack.c.l.b16 %v495
        %v663 = vunpack.c.l.b16 %v496
        %v664 = vunpack.c.l.b16 %v497
        %v665 = vunpack.c.l.b16 %v498
        %v666 = vunpack.c.l.b16 %v499
        %v667 = vunpack.c.l.b16 %v500
        %v668 = vunpack.c.l.b16 %v501
        %v669 = vunpack.c.l.b16 %v502
        %v670 = vunpack.c.l.b16 %v503
        %v671 = vunpack.c.l.b16 %v504
        %v672 = vunpack.c.l.b16 %v505
        %v673 = vunpack.c.l.b16 %v506
        %v674 = vunpack.c.l.b16 %v507
        %v675 = vunpack.c.l.b16 %v508
        %v676 = vunpack.c.l.b16 %v509
        %v677 = vunpack.c.l.b16 %v510
        %v678 = vunpack.c.l.b16 %v511
        %v679 = vunpack.c.l.b16 %v512
        %v680 = vunpack.c.l.b16 %v513
        %v681 = vunpack.c.l.b16 %v514
        %v682 = vunpack.c.l.b16 %v515
        %v683 = vunpack.c.l.b16 %v516
        %v684 = vunpack.c.l.b16 %v517
        %v685 = vunpack.c.l.b16 %v518
        %v686 = vunpack.c.l.b16 %v519
        %v687 = vunpack.c.l.b16 %v520
        %v688 = vunpack.c.l.b16 %v521
        %v689 = vunpack.c.l.b16 %v522
        %v690 = vunpack.c.l.b16 %v523
        %v691 = vunpack.c.l.b16 %v524
        %v692 = vunpack.c.l.b16 %v525
        %v693 = vunpack.c.l.b16 %v526
        %v694 = vunpack.c.l.b16 %v527
        %v695 = vunpack.c.l.b16 %v528
        %v696 = vunpack.c.l.b16 %v529
        %v697 = vunpack.c.l.b16 %v530
        %v698 = vunpack.c.l.b16 %v531
        %v699 = vunpack.c.l.b16 %v532
        %v700 = vunpack.c.l.b16 %v533
        %v701 = vunpack.c.l.b16 %v534
        %v702 = vunpack.c.l.b16 %v535
        %v703 = vunpack.c.l.b16 %v536
        %v704 = vunpack.c.l.b16 %v537
        %v705 = vunpack.c.l.b16 %v538
        %v706 = vunpack.c.l.b16 %v539
        %v707 = vunpack.c.l.b16 %v540
        %v708 = vunpack.c.l.b16 %v541
        %v709 = vunpack.c.l.b16 %v542
        %v710 = vunpack.c.l.b16 %v543
        %v711 = vunpack.c.l.b16 %v544
        %v712 = vunpack.c.l.b16 %v545
        %v713 = vunpack.c.l.b16 %v546
        %v714 = vunpack.c.l.b16 %v547
        %v715 = vunpack.c.l.b16 %v548
        %v716 = vunpack.c.l.b16 %v549
        %v717 = vunpack.c.l.b16 %v550
        %v718 = vunpack.c.l.b16 %v551
        %v719 = vunpack.c.l.b16 %v552
        %v720 = vunpack.c.l.b16 %v553
        %v721 = vunpack.c.l.b16 %v554
        %v722 = vunpack.c.l.b16 %v555
        %v723 = vunpack.c.l.b16 %v556
        %v724 = vunpack.c.l.b16 %v557
        %v725 = vunpack.c.l.b16 %v558
        %v726 = vunpack.c.l.b16 %v559
        %v727 = vunpack.c.l.b16 %v560
        %v728 = vunpack.c.l.b16 %v561
        %v729 = vunpack.c.l.b16 %v562
        %v730 = vunpack.c.l.b16 %v563
        %v731 = vunpack.c.l.b16 %v564
        %v732 = vunpack.c.l.b16 %v565
        %v733 = vunpack.c.l.b16 %v566
        %v734 = vunpack.c.l.b16 %v567
        %v735 = vunpack.c.l.b16 %v568
        %v736 = vunpack.c.l.b16 %v569
        %v737 = vunpack.c.l.b16 %v570
        %v738 = vunpack.c.l.b16 %v571
        %v739 = vunpack.c.l.b16 %v572
        %v740 = vunpack.c.l.b16 %v573
        %v741 = vpack.c.b16 %v662, %v661
        %v742 = vpack.c.b16 %v664, %v663
        %v743 = vpack.c.b16 %v666, %v665
        %v744 = vpack.c.b16 %v668, %v667
        %v745 = vpack.c.b16 %v670, %v669
        %v746 = vpack.c.b16 %v672, %v671
        %v747 = vpack.c.b16 %v674, %v673
        %v748 = vpack.c.b16 %v676, %v675
        %v749 = vpack.c.b16 %v678, %v677
        %v750 = vpack.c.b16 %v680, %v679
        %v751 = vpack.c.b16 %v682, %v681
        %v752 = vpack.c.b16 %v684, %v683
        %v753 = vpack.c.b16 %v686, %v685
        %v754 = vpack.c.b16 %v688, %v687
        %v755 = vpack.c.b16 %v690, %v689
        %v756 = vpack.c.b16 %v692, %v691
        %v757 = vpack.c.b16 %v694, %v693
        %v758 = vpack.c.b16 %v696, %v695
        %v759 = vpack.c.b16 %v698, %v697
        %v760 = vpack.c.b16 %v700, %v699
        %v761 = vpack.c.b16 %v702, %v701
        %v762 = vpack.c.b16 %v704, %v703
        %v763 = vpack.c.b16 %v706, %v705
        %v764 = vpack.c.b16 %v708, %v707
        %v765 = vpack.c.b16 %v710, %v709
        %v766 = vpack.c.b16 %v712, %v711
        %v767 = vpack.c.b16 %v714, %v713
        %v768 = vpack.c.b16 %v716, %v715
        %v769 = vpack.c.b16 %v718, %v717
        %v770 = vpack.c.b16 %v720, %v719
        %v771 = vpack.c.b16 %v722, %v721
        %v772 = vpack.c.b16 %v724, %v723
        %v773 = vpack.c.b16 %v726, %v725
        %v774 = vpack.c.b16 %v728, %v727
        %v775 = vpack.c.b16 %v730, %v729
        %v776 = vpack.c.b16 %v732, %v731
        %v777 = vpack.c.b16 %v734, %v733
        %v778 = vpack.c.b16 %v736, %v735
        %v779 = vpack.c.b16 %v738, %v737
        %v780 = vpack.c.b16 %v740, %v739
        %821 = vmatprep.subr.bf16.mxu0 0
        %822 = vmatpush1.bf16.msra.mxu0 %v741
        %823 = vmatprep.subr.bf16.mxu0 0
        %824 = vmatpush1.bf16.msra.mxu0 %v742
        %825 = vmatprep.subr.bf16.mxu0 0
        %826 = vmatpush1.bf16.msra.mxu0 %v743
        %827 = vmatprep.subr.bf16.mxu0 0
        %828 = vmatpush1.bf16.msra.mxu0 %v744
        %829 = vmatprep.subr.bf16.mxu0 0
        %830 = vmatpush1.bf16.msra.mxu0 %v745
        %831 = vmatprep.subr.bf16.mxu0 0
        %832 = vmatpush1.bf16.msra.mxu0 %v746
        %833 = vmatprep.subr.bf16.mxu0 0
        %834 = vmatpush1.bf16.msra.mxu0 %v747
        %835 = vmatprep.subr.bf16.mxu0 0
        %836 = vmatpush1.bf16.msra.mxu0 %v748
        %837 = vmatprep.subr.bf16.mxu0 0
        %838 = vmatpush1.bf16.msra.mxu0 %v749
        %839 = vmatprep.subr.bf16.mxu0 0
        %840 = vmatpush1.bf16.msra.mxu0 %v750
        %841 = vmatprep.subr.bf16.mxu0 0
        %842 = vmatpush1.bf16.msra.mxu0 %v751
        %843 = vmatprep.subr.bf16.mxu0 0
        %844 = vmatpush1.bf16.msra.mxu0 %v752
        %845 = vmatprep.subr.bf16.mxu0 0
        %846 = vmatpush1.bf16.msra.mxu0 %v753
        %847 = vmatprep.subr.bf16.mxu0 0
        %848 = vmatpush1.bf16.msra.mxu0 %v754
        %849 = vmatprep.subr.bf16.mxu0 0
        %850 = vmatpush1.bf16.msra.mxu0 %v755
        %851 = vmatprep.subr.bf16.mxu0 0
        %852 = vmatpush1.bf16.msra.mxu0 %v756
        %853 = vmatprep.mubr.bf16.mxu0 %v466
        %854 = vmatmul.mubr.bf16.gmra.mrb[0].mxu0 %v447
        %v855 = vpop.f32.mrb[0].mxu0
        %v856 = vadd.f32 %v579, %v855
        %v857 = vpop.f32.mrb[0].mxu0
        %v858 = vpop.f32.mrb[0].mxu0
        %v859 = vadd.f32 %v579, %v858
        %v860 = vpop.f32.mrb[0].mxu0
        %861 = vmatprep.mubr.bf16.mxu0 %v469
        %862 = vmatmul.mubr.bf16.gmra.mrb[0].mxu0 %v448
        %v863 = vpop.f32.mrb[0].mxu0
        %v864 = vadd.f32 %v579, %v863
        %v865 = vpop.f32.mrb[0].mxu0
        %v866 = vpop.f32.mrb[0].mxu0
        %v867 = vpop.f32.mrb[0].mxu0
        %868 = vdwg.mxu0
        %869 = vmatprep.subr.bf16.mxu0 0
        %870 = vmatpush1.bf16.msra.mxu0 %v757
        %871 = vmatprep.subr.bf16.mxu0 0
        %872 = vmatpush1.bf16.msra.mxu0 %v758
        %873 = vmatprep.subr.bf16.mxu0 0
        %874 = vmatpush1.bf16.msra.mxu0 %v759
        %875 = vmatprep.subr.bf16.mxu0 0
        %876 = vmatpush1.bf16.msra.mxu0 %v760
        %877 = vmatprep.subr.bf16.mxu0 0
        %878 = vmatpush1.bf16.msra.mxu0 %v761
        %879 = vmatprep.subr.bf16.mxu0 0
        %880 = vmatpush1.bf16.msra.mxu0 %v762
        %881 = vmatprep.subr.bf16.mxu0 0
        %882 = vmatpush1.bf16.msra.mxu0 %v763
        %883 = vmatprep.subr.bf16.mxu0 0
        %884 = vmatpush1.bf16.msra.mxu0 %v764
        %885 = vmatprep.subr.bf16.mxu0 0
        %886 = vmatpush1.bf16.msra.mxu0 %v765
        %887 = vmatprep.subr.bf16.mxu0 0
        %888 = vmatpush1.bf16.msra.mxu0 %v766
        %889 = vmatprep.subr.bf16.mxu0 0
        %890 = vmatpush1.bf16.msra.mxu0 %v767
        %891 = vmatprep.subr.bf16.mxu0 0
        %892 = vmatpush1.bf16.msra.mxu0 %v768
        %893 = vmatprep.subr.bf16.mxu0 0
        %894 = vmatpush1.bf16.msra.mxu0 %v769
        %895 = vmatprep.subr.bf16.mxu0 0
        %896 = vmatpush1.bf16.msra.mxu0 %v770
        %897 = vmatprep.subr.bf16.mxu0 0
        %898 = vmatpush1.bf16.msra.mxu0 %v771
        %899 = vmatprep.subr.bf16.mxu0 0
        %900 = vmatpush1.bf16.msra.mxu0 %v772
        %901 = vmatprep.mubr.bf16.mxu0 %v485
        %902 = vmatmul.mubr.bf16.gmra.mrb[0].mxu0 %v475
        %v903 = vpop.f32.mrb[0].mxu0
        %v904 = vadd.f32 %v856, %v903
        %v905 = vpop.f32.mrb[0].mxu0
        %v906 = vpop.f32.mrb[0].mxu0
        %v907 = vadd.f32 %v859, %v906
        %v908 = vpop.f32.mrb[0].mxu0
        %909 = vmatprep.mubr.bf16.mxu0 %v484
        %910 = vmatmul.mubr.bf16.gmra.mrb[0].mxu0 %v474
        %v911 = vpop.f32.mrb[0].mxu0
        %v912 = vadd.f32 %v864, %v911
        %v913 = vpop.f32.mrb[0].mxu0
        %v914 = vpop.f32.mrb[0].mxu0
        %v915 = vpop.f32.mrb[0].mxu0
        %916 = vdwg.mxu0
        %917 = vmatprep.subr.bf16.mxu0 0
        %918 = vmatpush1.bf16.msra.mxu0 %v773
        %919 = vmatprep.subr.bf16.mxu0 0
        %920 = vmatpush1.bf16.msra.mxu0 %v774
        %921 = vmatprep.subr.bf16.mxu0 0
        %922 = vmatpush1.bf16.msra.mxu0 %v775
        %923 = vmatprep.subr.bf16.mxu0 0
        %924 = vmatpush1.bf16.msra.mxu0 %v776
        %925 = vmatprep.subr.bf16.mxu0 0
        %926 = vmatpush1.bf16.msra.mxu0 %v777
        %927 = vmatprep.subr.bf16.mxu0 0
        %928 = vmatpush1.bf16.msra.mxu0 %v778
        %929 = vmatprep.subr.bf16.mxu0 0
        %930 = vmatpush1.bf16.msra.mxu0 %v779
        %931 = vmatprep.subr.bf16.mxu0 0
        %932 = vmatpush1.bf16.msra.mxu0 %v780
        %933 = vmatprep.subr.bf16.mxu0 0
        %934 = vmatpush1.bf16.msra.mxu0 0
        %935 = vmatprep.subr.bf16.mxu0 0
        %936 = vmatpush1.bf16.msra.mxu0 0
        %937 = vmatprep.subr.bf16.mxu0 0
        %938 = vmatpush1.bf16.msra.mxu0 0
        %939 = vmatprep.subr.bf16.mxu0 0
        %940 = vmatpush1.bf16.msra.mxu0 0
        %941 = vmatprep.subr.bf16.mxu0 0
        %942 = vmatpush1.bf16.msra.mxu0 0
        %943 = vmatprep.subr.bf16.mxu0 0
        %944 = vmatpush1.bf16.msra.mxu0 0
        %945 = vmatprep.subr.bf16.mxu0 0
        %946 = vmatpush1.bf16.msra.mxu0 0
        %947 = vmatprep.subr.bf16.mxu0 0
        %948 = vmatpush1.bf16.msra.mxu0 0
        %949 = vmatprep.mubr.bf16.mxu0 0
        %950 = vmatmul.mubr.bf16.gmra.mrb[0].mxu0 %v491
        %v951 = vpop.f32.mrb[0].mxu0
        %v952 = vadd.f32 %v904, %v951
        %v953 = vpop.f32.mrb[0].mxu0
        %v954 = vpop.f32.mrb[0].mxu0
        %v955 = vadd.f32 %v907, %v954
        %v956 = vpop.f32.mrb[0].mxu0
        %957 = vmatprep.mubr.bf16.mxu0 0
        %958 = vmatmul.mubr.bf16.gmra.mrb[0].mxu0 %v490
        %v959 = vpop.f32.mrb[0].mxu0
        %v960 = vadd.f32 %v912, %v959
        %v961 = vpop.f32.mrb[0].mxu0
        %v962 = vpop.f32.mrb[0].mxu0
        %v963 = vpop.f32.mrb[0].mxu0
        %964 = vdwg.mxu0
        %v965 = vmax.f32 %v952, 0.0
        %v966 = vmax.f32 %v955, 0.0
        %v967 = vmax.f32 %v960, 0.0
        %v968 = vpack.c.bf16 %v966, %v965
        %v969 = vpack.c.bf16 %v967, %v967
        %v970 = vld [vmem:[#allocation7] sm:$0xf]
        %v971 = vld [vmem:[#allocation7 + $0x4] sm:$0xf]
        %v972 = vld [vmem:[#allocation7 + $0x8] sm:$0xf]
        %v973 = vld [vmem:[#allocation7 + $0xc] sm:$0xf]
        %v974 = vld [vmem:[#allocation7 + $0x10] sm:$0xf]
        %v975 = vld [vmem:[#allocation7 + $0x14] sm:$0xf]
        %v976 = vld [vmem:[#allocation7 + $0x18] sm:$0xf]
        %v977 = vld [vmem:[#allocation7 + $0x1c] sm:$0xf]
        %v978 = vld [vmem:[#allocation7 + $0x20] sm:$0xf]
        %v979 = vld [vmem:[#allocation7 + $0x24] sm:$0xf]
        %v980 = vld [vmem:[#allocation7 + $0x28] sm:$0xf]
        %v981 = vld [vmem:[#allocation7 + $0x2c] sm:$0xf]
        %v982 = vld [vmem:[#allocation7 + $0x30] sm:$0xf]
        %v983 = vld [vmem:[#allocation7 + $0x34] sm:$0xf]
        %v984 = vld [vmem:[#allocation7 + $0x38] sm:$0xf]
        %v985 = vld [vmem:[#allocation7 + $0x3c] sm:$0xf]
        %v986 = vld [vmem:[%s6] sm:$0x1]
        %v988 = vlaneseq
        %v989 = vshrl.u32 %v988, 7
        %v990 = vsub.s32 0, %v989
        %v991 = vrot.slane %v986, %v990
        %v1009 = vunpack.c.l.b16 %v970
        %v1010 = vunpack.c.l.b16 %v971
        %v1011 = vunpack.c.l.b16 %v972
        %v1012 = vunpack.c.l.b16 %v973
        %v1013 = vunpack.c.l.b16 %v974
        %v1014 = vunpack.c.l.b16 %v975
        %v1015 = vunpack.c.l.b16 %v976
        %v1016 = vunpack.c.l.b16 %v977
        %v1017 = vunpack.c.l.b16 %v978
        %v1018 = vunpack.c.l.b16 %v979
        %v1019 = vunpack.c.l.b16 %v980
        %v1020 = vunpack.c.l.b16 %v981
        %v1021 = vunpack.c.l.b16 %v982
        %v1022 = vunpack.c.l.b16 %v983
        %v1023 = vunpack.c.l.b16 %v984
        %v1024 = vunpack.c.l.b16 %v985
        %v1025 = vpack.c.b16 %v1010, %v1009
        %v1026 = vpack.c.b16 %v1012, %v1011
        %v1027 = vpack.c.b16 %v1014, %v1013
        %v1028 = vpack.c.b16 %v1016, %v1015
        %v1029 = vpack.c.b16 %v1018, %v1017
        %v1030 = vpack.c.b16 %v1020, %v1019
        %v1031 = vpack.c.b16 %v1022, %v1021
        %v1032 = vpack.c.b16 %v1024, %v1023
        %1041 = vmatprep.subr.bf16.mxu0 0
        %1042 = vmatpush1.bf16.msra.mxu0 %v1025
        %1043 = vmatprep.subr.bf16.mxu0 0
        %1044 = vmatpush1.bf16.msra.mxu0 %v1026
        %1045 = vmatprep.subr.bf16.mxu0 0
        %1046 = vmatpush1.bf16.msra.mxu0 %v1027
        %1047 = vmatprep.subr.bf16.mxu0 0
        %1048 = vmatpush1.bf16.msra.mxu0 %v1028
        %1049 = vmatprep.subr.bf16.mxu0 0
        %1050 = vmatpush1.bf16.msra.mxu0 %v1029
        %1051 = vmatprep.subr.bf16.mxu0 0
        %1052 = vmatpush1.bf16.msra.mxu0 %v1030
        %1053 = vmatprep.subr.bf16.mxu0 0
        %1054 = vmatpush1.bf16.msra.mxu0 %v1031
        %1055 = vmatprep.subr.bf16.mxu0 0
        %1056 = vmatpush1.bf16.msra.mxu0 %v1032
        %1057 = vmatprep.subr.bf16.mxu0 0
        %1058 = vmatpush1.bf16.msra.mxu0 0
        %1059 = vmatprep.subr.bf16.mxu0 0
        %1060 = vmatpush1.bf16.msra.mxu0 0
        %1061 = vmatprep.subr.bf16.mxu0 0
        %1062 = vmatpush1.bf16.msra.mxu0 0
        %1063 = vmatprep.subr.bf16.mxu0 0
        %1064 = vmatpush1.bf16.msra.mxu0 0
        %1065 = vmatprep.subr.bf16.mxu0 0
        %1066 = vmatpush1.bf16.msra.mxu0 0
        %1067 = vmatprep.subr.bf16.mxu0 0
        %1068 = vmatpush1.bf16.msra.mxu0 0
        %1069 = vmatprep.subr.bf16.mxu0 0
        %1070 = vmatpush1.bf16.msra.mxu0 0
        %1071 = vmatprep.subr.bf16.mxu0 0
        %1072 = vmatpush1.bf16.msra.mxu0 0
        %1073 = vmatprep.mubr.bf16.mxu0 0
        %1074 = vmatmul.mubr.bf16.gmra.mrb[0].mxu0 %v968
        %v1075 = vpop.f32.mrb[0].mxu0
        %v1076 = vadd.f32 %v991, %v1075
        %v1077 = vpop.f32.mrb[0].mxu0
        %v1078 = vpop.f32.mrb[0].mxu0
        %v1079 = vadd.f32 %v991, %v1078
        %v1080 = vpop.f32.mrb[0].mxu0
        %1081 = vmatprep.mubr.bf16.mxu0 0
        %1082 = vmatmul.mubr.bf16.gmra.mrb[0].mxu0 %v969
        %v1083 = vpop.f32.mrb[0].mxu0
        %v1084 = vadd.f32 %v991, %v1083
        %v1085 = vpop.f32.mrb[0].mxu0
        %v1086 = vpop.f32.mrb[0].mxu0
        %v1087 = vpop.f32.mrb[0].mxu0
        %1088 = vdwg.mxu0
        %v1089 = vld [vmem:[%s9] sm:$0xff]
        %v1090 = vld [vmem:[%s9 + $0x8] sm:$0xff]
        %v1091 = vld [vmem:[%s9 + $0x10] sm:$0xff]
        %1093 = vset.pattern.permute.xlu0 0
        %1094 = vperm.xlu0 %1093, %v1089
        %v1095 = vpop.permute.xlu0 %1094
        %1098 = vset.pattern.permute.xlu0 0
        %1099 = vperm.xlu0 %1098, %v1090
        %v1100 = vpop.permute.xlu0 %1099
        %1103 = vset.pattern.permute.xlu0 0
        %1104 = vperm.xlu0 %1103, %v1091
        %v1105 = vpop.permute.xlu0 %1104
        %v1107 = vmul.f32 %v1076, %v1095
        %v1108 = vmul.f32 %v1079, %v1100
        %v1109 = vmul.f32 %v1084, %v1105
        %v1110 = vpack.c.bf16 %v1108, %v1107
        %v1111 = vpack.c.bf16 %v1109, %v1109
        %v1113 = vshrl.u32 %v1110, 16
        %v1115 = vshll.u32 %v1110, 16
        %v1117 = vrot.slane %v1115, 1
        %v1118 = vor.u32 %v1113, %v1117
        %v1120 = vshll.u32 %v1111, 16
        %v1122 = vrot.slane %v1120, 1
        %v1123 = vsel %vm454, %v1118, %v1122
        %v1127 = vrot.slane %v1110, 1
        %v1128 = vrot.slane %v1111, 1
        %v1129 = vsel %vm472, %v1127, %v1128
        %v1131 = vrot.slane %v1113, 1
        %v1132 = vrot.slane %v1115, 2
        %v1133 = vor.u32 %v1131, %v1132
        %v1134 = vshrl.u32 %v1111, 16
        %v1136 = vrot.slane %v1134, 1
        %v1137 = vrot.slane %v1120, 2
        %v1138 = vor.u32 %v1136, %v1137
        %v1139 = vsel %vm478, %v1133, %v1138
        %v1141 = vrot.slane %v1110, 2
        %v1142 = vrot.slane %v1111, 2
        %v1143 = vsel %vm488, %v1141, %v1142
        %v1145 = vld [vmem:[#allocation8] sm:$0xf]
        %v1146 = vld [vmem:[#allocation8 + $0x4] sm:$0xf]
        %v1147 = vld [vmem:[#allocation8 + $0x8] sm:$0xf]
        %v1148 = vld [vmem:[#allocation8 + $0xc] sm:$0xf]
        %v1149 = vld [vmem:[#allocation8 + $0x10] sm:$0xf]
        %v1150 = vld [vmem:[#allocation8 + $0x14] sm:$0xf]
        %v1151 = vld [vmem:[#allocation8 + $0x18] sm:$0xf]
        %v1152 = vld [vmem:[#allocation8 + $0x1c] sm:$0xf]
        %v1153 = vld [vmem:[#allocation8 + $0x20] sm:$0xf]
        %v1154 = vld [vmem:[#allocation8 + $0x24] sm:$0xf]
        %v1155 = vld [vmem:[#allocation8 + $0x28] sm:$0xf]
        %v1156 = vld [vmem:[#allocation8 + $0x2c] sm:$0xf]
        %v1157 = vld [vmem:[#allocation8 + $0x30] sm:$0xf]
        %v1158 = vld [vmem:[#allocation8 + $0x34] sm:$0xf]
        %v1159 = vld [vmem:[#allocation8 + $0x38] sm:$0xf]
        %v1160 = vld [vmem:[#allocation8 + $0x3c] sm:$0xf]
        %v1161 = vld [vmem:[#allocation8 + $0x40] sm:$0xf]
        %v1162 = vld [vmem:[#allocation8 + $0x44] sm:$0xf]
        %v1163 = vld [vmem:[#allocation8 + $0x48] sm:$0xf]
        %v1164 = vld [vmem:[#allocation8 + $0x4c] sm:$0xf]
        %v1165 = vld [vmem:[#allocation8 + $0x50] sm:$0xf]
        %v1166 = vld [vmem:[#allocation8 + $0x54] sm:$0xf]
        %v1167 = vld [vmem:[#allocation8 + $0x58] sm:$0xf]
        %v1168 = vld [vmem:[#allocation8 + $0x5c] sm:$0xf]
        %v1169 = vld [vmem:[#allocation8 + $0x60] sm:$0xf]
        %v1170 = vld [vmem:[#allocation8 + $0x64] sm:$0xf]
        %v1171 = vld [vmem:[#allocation8 + $0x68] sm:$0xf]
        %v1172 = vld [vmem:[#allocation8 + $0x6c] sm:$0xf]
        %v1173 = vld [vmem:[#allocation8 + $0x70] sm:$0xf]
        %v1174 = vld [vmem:[#allocation8 + $0x74] sm:$0xf]
        %v1175 = vld [vmem:[#allocation8 + $0x78] sm:$0xf]
        %v1176 = vld [vmem:[#allocation8 + $0x7c] sm:$0xf]
        %v1177 = vld [vmem:[#allocation8 + $0x80] sm:$0xf]
        %v1178 = vld [vmem:[#allocation8 + $0x84] sm:$0xf]
        %v1179 = vld [vmem:[#allocation8 + $0x88] sm:$0xf]
        %v1180 = vld [vmem:[#allocation8 + $0x8c] sm:$0xf]
        %v1181 = vld [vmem:[#allocation8 + $0x90] sm:$0xf]
        %v1182 = vld [vmem:[#allocation8 + $0x94] sm:$0xf]
        %v1183 = vld [vmem:[#allocation8 + $0x98] sm:$0xf]
        %v1184 = vld [vmem:[#allocation8 + $0x9c] sm:$0xf]
        %v1185 = vld [vmem:[#allocation8 + $0xa0] sm:$0xf]
        %v1186 = vld [vmem:[#allocation8 + $0xa4] sm:$0xf]
        %v1187 = vld [vmem:[#allocation8 + $0xa8] sm:$0xf]
        %v1188 = vld [vmem:[#allocation8 + $0xac] sm:$0xf]
        %v1189 = vld [vmem:[#allocation8 + $0xb0] sm:$0xf]
        %v1190 = vld [vmem:[#allocation8 + $0xb4] sm:$0xf]
        %v1191 = vld [vmem:[#allocation8 + $0xb8] sm:$0xf]
        %v1192 = vld [vmem:[#allocation8 + $0xbc] sm:$0xf]
        %v1193 = vld [vmem:[#allocation8 + $0xc0] sm:$0xf]
        %v1194 = vld [vmem:[#allocation8 + $0xc4] sm:$0xf]
        %v1195 = vld [vmem:[#allocation8 + $0xc8] sm:$0xf]
        %v1196 = vld [vmem:[#allocation8 + $0xcc] sm:$0xf]
        %v1197 = vld [vmem:[#allocation8 + $0xd0] sm:$0xf]
        %v1198 = vld [vmem:[#allocation8 + $0xd4] sm:$0xf]
        %v1199 = vld [vmem:[#allocation8 + $0xd8] sm:$0xf]
        %v1200 = vld [vmem:[#allocation8 + $0xdc] sm:$0xf]
        %v1201 = vld [vmem:[#allocation8 + $0xe0] sm:$0xf]
        %v1202 = vld [vmem:[#allocation8 + $0xe4] sm:$0xf]
        %v1203 = vld [vmem:[#allocation8 + $0xe8] sm:$0xf]
        %v1204 = vld [vmem:[#allocation8 + $0xec] sm:$0xf]
        %v1205 = vld [vmem:[#allocation8 + $0xf0] sm:$0xf]
        %v1206 = vld [vmem:[#allocation8 + $0xf4] sm:$0xf]
        %v1207 = vld [vmem:[#allocation8 + $0xf8] sm:$0xf]
        %v1208 = vld [vmem:[#allocation8 + $0xfc] sm:$0xf]
        %v1209 = vld [vmem:[#allocation8 + $0x100] sm:$0xf]
        %v1210 = vld [vmem:[#allocation8 + $0x104] sm:$0xf]
        %v1211 = vld [vmem:[#allocation8 + $0x108] sm:$0xf]
        %v1212 = vld [vmem:[#allocation8 + $0x10c] sm:$0xf]
        %v1213 = vld [vmem:[#allocation8 + $0x110] sm:$0xf]
        %v1214 = vld [vmem:[#allocation8 + $0x114] sm:$0xf]
        %v1215 = vld [vmem:[#allocation8 + $0x118] sm:$0xf]
        %v1216 = vld [vmem:[#allocation8 + $0x11c] sm:$0xf]
        %v1217 = vld [vmem:[#allocation8 + $0x120] sm:$0xf]
        %v1218 = vld [vmem:[#allocation8 + $0x124] sm:$0xf]
        %v1219 = vld [vmem:[#allocation8 + $0x128] sm:$0xf]
        %v1220 = vld [vmem:[#allocation8 + $0x12c] sm:$0xf]
        %v1221 = vld [vmem:[#allocation8 + $0x130] sm:$0xf]
        %v1222 = vld [vmem:[#allocation8 + $0x134] sm:$0xf]
        %v1223 = vld [vmem:[#allocation8 + $0x138] sm:$0xf]
        %v1224 = vld [vmem:[#allocation8 + $0x13c] sm:$0xf]
        %v1225 = vld [vmem:[%s7] sm:$0x1]
        %v1227 = vlaneseq
        %v1228 = vshrl.u32 %v1227, 7
        %v1229 = vsub.s32 0, %v1228
        %v1230 = vrot.slane %v1225, %v1229
        %v1312 = vunpack.c.l.b16 %v1145
        %v1313 = vunpack.c.l.b16 %v1146
        %v1314 = vunpack.c.l.b16 %v1147
        %v1315 = vunpack.c.l.b16 %v1148
        %v1316 = vunpack.c.l.b16 %v1149
        %v1317 = vunpack.c.l.b16 %v1150
        %v1318 = vunpack.c.l.b16 %v1151
        %v1319 = vunpack.c.l.b16 %v1152
        %v1320 = vunpack.c.l.b16 %v1153
        %v1321 = vunpack.c.l.b16 %v1154
        %v1322 = vunpack.c.l.b16 %v1155
        %v1323 = vunpack.c.l.b16 %v1156
        %v1324 = vunpack.c.l.b16 %v1157
        %v1325 = vunpack.c.l.b16 %v1158
        %v1326 = vunpack.c.l.b16 %v1159
        %v1327 = vunpack.c.l.b16 %v1160
        %v1328 = vunpack.c.l.b16 %v1161
        %v1329 = vunpack.c.l.b16 %v1162
        %v1330 = vunpack.c.l.b16 %v1163
        %v1331 = vunpack.c.l.b16 %v1164
        %v1332 = vunpack.c.l.b16 %v1165
        %v1333 = vunpack.c.l.b16 %v1166
        %v1334 = vunpack.c.l.b16 %v1167
        %v1335 = vunpack.c.l.b16 %v1168
        %v1336 = vunpack.c.l.b16 %v1169
        %v1337 = vunpack.c.l.b16 %v1170
        %v1338 = vunpack.c.l.b16 %v1171
        %v1339 = vunpack.c.l.b16 %v1172
        %v1340 = vunpack.c.l.b16 %v1173
        %v1341 = vunpack.c.l.b16 %v1174
        %v1342 = vunpack.c.l.b16 %v1175
        %v1343 = vunpack.c.l.b16 %v1176
        %v1344 = vunpack.c.l.b16 %v1177
        %v1345 = vunpack.c.l.b16 %v1178
        %v1346 = vunpack.c.l.b16 %v1179
        %v1347 = vunpack.c.l.b16 %v1180
        %v1348 = vunpack.c.l.b16 %v1181
        %v1349 = vunpack.c.l.b16 %v1182
        %v1350 = vunpack.c.l.b16 %v1183
        %v1351 = vunpack.c.l.b16 %v1184
        %v1352 = vunpack.c.l.b16 %v1185
        %v1353 = vunpack.c.l.b16 %v1186
        %v1354 = vunpack.c.l.b16 %v1187
        %v1355 = vunpack.c.l.b16 %v1188
        %v1356 = vunpack.c.l.b16 %v1189
        %v1357 = vunpack.c.l.b16 %v1190
        %v1358 = vunpack.c.l.b16 %v1191
        %v1359 = vunpack.c.l.b16 %v1192
        %v1360 = vunpack.c.l.b16 %v1193
        %v1361 = vunpack.c.l.b16 %v1194
        %v1362 = vunpack.c.l.b16 %v1195
        %v1363 = vunpack.c.l.b16 %v1196
        %v1364 = vunpack.c.l.b16 %v1197
        %v1365 = vunpack.c.l.b16 %v1198
        %v1366 = vunpack.c.l.b16 %v1199
        %v1367 = vunpack.c.l.b16 %v1200
        %v1368 = vunpack.c.l.b16 %v1201
        %v1369 = vunpack.c.l.b16 %v1202
        %v1370 = vunpack.c.l.b16 %v1203
        %v1371 = vunpack.c.l.b16 %v1204
        %v1372 = vunpack.c.l.b16 %v1205
        %v1373 = vunpack.c.l.b16 %v1206
        %v1374 = vunpack.c.l.b16 %v1207
        %v1375 = vunpack.c.l.b16 %v1208
        %v1376 = vunpack.c.l.b16 %v1209
        %v1377 = vunpack.c.l.b16 %v1210
        %v1378 = vunpack.c.l.b16 %v1211
        %v1379 = vunpack.c.l.b16 %v1212
        %v1380 = vunpack.c.l.b16 %v1213
        %v1381 = vunpack.c.l.b16 %v1214
        %v1382 = vunpack.c.l.b16 %v1215
        %v1383 = vunpack.c.l.b16 %v1216
        %v1384 = vunpack.c.l.b16 %v1217
        %v1385 = vunpack.c.l.b16 %v1218
        %v1386 = vunpack.c.l.b16 %v1219
        %v1387 = vunpack.c.l.b16 %v1220
        %v1388 = vunpack.c.l.b16 %v1221
        %v1389 = vunpack.c.l.b16 %v1222
        %v1390 = vunpack.c.l.b16 %v1223
        %v1391 = vunpack.c.l.b16 %v1224
        %v1392 = vpack.c.b16 %v1313, %v1312
        %v1393 = vpack.c.b16 %v1315, %v1314
        %v1394 = vpack.c.b16 %v1317, %v1316
        %v1395 = vpack.c.b16 %v1319, %v1318
        %v1396 = vpack.c.b16 %v1321, %v1320
        %v1397 = vpack.c.b16 %v1323, %v1322
        %v1398 = vpack.c.b16 %v1325, %v1324
        %v1399 = vpack.c.b16 %v1327, %v1326
        %v1400 = vpack.c.b16 %v1329, %v1328
        %v1401 = vpack.c.b16 %v1331, %v1330
        %v1402 = vpack.c.b16 %v1333, %v1332
        %v1403 = vpack.c.b16 %v1335, %v1334
        %v1404 = vpack.c.b16 %v1337, %v1336
        %v1405 = vpack.c.b16 %v1339, %v1338
        %v1406 = vpack.c.b16 %v1341, %v1340
        %v1407 = vpack.c.b16 %v1343, %v1342
        %v1408 = vpack.c.b16 %v1345, %v1344
        %v1409 = vpack.c.b16 %v1347, %v1346
        %v1410 = vpack.c.b16 %v1349, %v1348
        %v1411 = vpack.c.b16 %v1351, %v1350
        %v1412 = vpack.c.b16 %v1353, %v1352
        %v1413 = vpack.c.b16 %v1355, %v1354
        %v1414 = vpack.c.b16 %v1357, %v1356
        %v1415 = vpack.c.b16 %v1359, %v1358
        %v1416 = vpack.c.b16 %v1361, %v1360
        %v1417 = vpack.c.b16 %v1363, %v1362
        %v1418 = vpack.c.b16 %v1365, %v1364
        %v1419 = vpack.c.b16 %v1367, %v1366
        %v1420 = vpack.c.b16 %v1369, %v1368
        %v1421 = vpack.c.b16 %v1371, %v1370
        %v1422 = vpack.c.b16 %v1373, %v1372
        %v1423 = vpack.c.b16 %v1375, %v1374
        %v1424 = vpack.c.b16 %v1377, %v1376
        %v1425 = vpack.c.b16 %v1379, %v1378
        %v1426 = vpack.c.b16 %v1381, %v1380
        %v1427 = vpack.c.b16 %v1383, %v1382
        %v1428 = vpack.c.b16 %v1385, %v1384
        %v1429 = vpack.c.b16 %v1387, %v1386
        %v1430 = vpack.c.b16 %v1389, %v1388
        %v1431 = vpack.c.b16 %v1391, %v1390
        %1472 = vmatprep.subr.bf16.mxu0 0
        %1473 = vmatpush1.bf16.msra.mxu0 %v1392
        %1474 = vmatprep.subr.bf16.mxu0 0
        %1475 = vmatpush1.bf16.msra.mxu0 %v1393
        %1476 = vmatprep.subr.bf16.mxu0 0
        %1477 = vmatpush1.bf16.msra.mxu0 %v1394
        %1478 = vmatprep.subr.bf16.mxu0 0
        %1479 = vmatpush1.bf16.msra.mxu0 %v1395
        %1480 = vmatprep.subr.bf16.mxu0 0
        %1481 = vmatpush1.bf16.msra.mxu0 %v1396
        %1482 = vmatprep.subr.bf16.mxu0 0
        %1483 = vmatpush1.bf16.msra.mxu0 %v1397
        %1484 = vmatprep.subr.bf16.mxu0 0
        %1485 = vmatpush1.bf16.msra.mxu0 %v1398
        %1486 = vmatprep.subr.bf16.mxu0 0
        %1487 = vmatpush1.bf16.msra.mxu0 %v1399
        %1488 = vmatprep.subr.bf16.mxu0 0
        %1489 = vmatpush1.bf16.msra.mxu0 %v1400
        %1490 = vmatprep.subr.bf16.mxu0 0
        %1491 = vmatpush1.bf16.msra.mxu0 %v1401
        %1492 = vmatprep.subr.bf16.mxu0 0
        %1493 = vmatpush1.bf16.msra.mxu0 %v1402
        %1494 = vmatprep.subr.bf16.mxu0 0
        %1495 = vmatpush1.bf16.msra.mxu0 %v1403
        %1496 = vmatprep.subr.bf16.mxu0 0
        %1497 = vmatpush1.bf16.msra.mxu0 %v1404
        %1498 = vmatprep.subr.bf16.mxu0 0
        %1499 = vmatpush1.bf16.msra.mxu0 %v1405
        %1500 = vmatprep.subr.bf16.mxu0 0
        %1501 = vmatpush1.bf16.msra.mxu0 %v1406
        %1502 = vmatprep.subr.bf16.mxu0 0
        %1503 = vmatpush1.bf16.msra.mxu0 %v1407
        %1504 = vmatprep.mubr.bf16.mxu0 %v1123
        %1505 = vmatmul.mubr.bf16.gmra.mrb[0].mxu0 %v1110
        %v1506 = vpop.f32.mrb[0].mxu0
        %v1507 = vadd.f32 %v1230, %v1506
        %v1508 = vpop.f32.mrb[0].mxu0
        %v1509 = vpop.f32.mrb[0].mxu0
        %v1510 = vadd.f32 %v1230, %v1509
        %v1511 = vpop.f32.mrb[0].mxu0
        %1512 = vdwg.mxu0
        %1513 = vmatprep.subr.bf16.mxu0 0
        %1514 = vmatpush1.bf16.msra.mxu0 %v1408
        %1515 = vmatprep.subr.bf16.mxu0 0
        %1516 = vmatpush1.bf16.msra.mxu0 %v1409
        %1517 = vmatprep.subr.bf16.mxu0 0
        %1518 = vmatpush1.bf16.msra.mxu0 %v1410
        %1519 = vmatprep.subr.bf16.mxu0 0
        %1520 = vmatpush1.bf16.msra.mxu0 %v1411
        %1521 = vmatprep.subr.bf16.mxu0 0
        %1522 = vmatpush1.bf16.msra.mxu0 %v1412
        %1523 = vmatprep.subr.bf16.mxu0 0
        %1524 = vmatpush1.bf16.msra.mxu0 %v1413
        %1525 = vmatprep.subr.bf16.mxu0 0
        %1526 = vmatpush1.bf16.msra.mxu0 %v1414
        %1527 = vmatprep.subr.bf16.mxu0 0
        %1528 = vmatpush1.bf16.msra.mxu0 %v1415
        %1529 = vmatprep.subr.bf16.mxu0 0
        %1530 = vmatpush1.bf16.msra.mxu0 %v1416
        %1531 = vmatprep.subr.bf16.mxu0 0
        %1532 = vmatpush1.bf16.msra.mxu0 %v1417
        %1533 = vmatprep.subr.bf16.mxu0 0
        %1534 = vmatpush1.bf16.msra.mxu0 %v1418
        %1535 = vmatprep.subr.bf16.mxu0 0
        %1536 = vmatpush1.bf16.msra.mxu0 %v1419
        %1537 = vmatprep.subr.bf16.mxu0 0
        %1538 = vmatpush1.bf16.msra.mxu0 %v1420
        %1539 = vmatprep.subr.bf16.mxu0 0
        %1540 = vmatpush1.bf16.msra.mxu0 %v1421
        %1541 = vmatprep.subr.bf16.mxu0 0
        %1542 = vmatpush1.bf16.msra.mxu0 %v1422
        %1543 = vmatprep.subr.bf16.mxu0 0
        %1544 = vmatpush1.bf16.msra.mxu0 %v1423
        %1545 = vmatprep.mubr.bf16.mxu0 %v1139
        %1546 = vmatmul.mubr.bf16.gmra.mrb[0].mxu0 %v1129
        %v1547 = vpop.f32.mrb[0].mxu0
        %v1548 = vadd.f32 %v1507, %v1547
        %v1549 = vpop.f32.mrb[0].mxu0
        %v1550 = vpop.f32.mrb[0].mxu0
        %v1551 = vadd.f32 %v1510, %v1550
        %v1552 = vpop.f32.mrb[0].mxu0
        %1553 = vdwg.mxu0
        %1554 = vmatprep.subr.bf16.mxu0 0
        %1555 = vmatpush1.bf16.msra.mxu0 %v1424
        %1556 = vmatprep.subr.bf16.mxu0 0
        %1557 = vmatpush1.bf16.msra.mxu0 %v1425
        %1558 = vmatprep.subr.bf16.mxu0 0
        %1559 = vmatpush1.bf16.msra.mxu0 %v1426
        %1560 = vmatprep.subr.bf16.mxu0 0
        %1561 = vmatpush1.bf16.msra.mxu0 %v1427
        %1562 = vmatprep.subr.bf16.mxu0 0
        %1563 = vmatpush1.bf16.msra.mxu0 %v1428
        %1564 = vmatprep.subr.bf16.mxu0 0
        %1565 = vmatpush1.bf16.msra.mxu0 %v1429
        %1566 = vmatprep.subr.bf16.mxu0 0
        %1567 = vmatpush1.bf16.msra.mxu0 %v1430
        %1568 = vmatprep.subr.bf16.mxu0 0
        %1569 = vmatpush1.bf16.msra.mxu0 %v1431
        %1570 = vmatprep.subr.bf16.mxu0 0
        %1571 = vmatpush1.bf16.msra.mxu0 0
        %1572 = vmatprep.subr.bf16.mxu0 0
        %1573 = vmatpush1.bf16.msra.mxu0 0
        %1574 = vmatprep.subr.bf16.mxu0 0
        %1575 = vmatpush1.bf16.msra.mxu0 0
        %1576 = vmatprep.subr.bf16.mxu0 0
        %1577 = vmatpush1.bf16.msra.mxu0 0
        %1578 = vmatprep.subr.bf16.mxu0 0
        %1579 = vmatpush1.bf16.msra.mxu0 0
        %1580 = vmatprep.subr.bf16.mxu0 0
        %1581 = vmatpush1.bf16.msra.mxu0 0
        %1582 = vmatprep.subr.bf16.mxu0 0
        %1583 = vmatpush1.bf16.msra.mxu0 0
        %1584 = vmatprep.subr.bf16.mxu0 0
        %1585 = vmatpush1.bf16.msra.mxu0 0
        %1586 = vmatprep.mubr.bf16.mxu0 0
        %1587 = vmatmul.mubr.bf16.gmra.mrb[0].mxu0 %v1143
        %v1588 = vpop.f32.mrb[0].mxu0
        %v1589 = vadd.f32 %v1548, %v1588
        %v1590 = vpop.f32.mrb[0].mxu0
        %v1591 = vpop.f32.mrb[0].mxu0
        %v1592 = vadd.f32 %v1551, %v1591
        %v1593 = vpop.f32.mrb[0].mxu0
        %1594 = vdwg.mxu0
        %v1595 = vmax.f32 %v1589, 0.0
        %v1596 = vmax.f32 %v1592, 0.0
        %v1597 = vpack.c.bf16 %v1596, %v1595
        %v1598 = vld [vmem:[#allocation10] sm:$0xf]
        %v1599 = vld [vmem:[#allocation10 + $0x4] sm:$0xf]
        %v1600 = vld [vmem:[#allocation10 + $0x8] sm:$0xf]
        %v1601 = vld [vmem:[#allocation10 + $0xc] sm:$0xf]
        %v1602 = vld [vmem:[#allocation10 + $0x10] sm:$0xf]
        %v1603 = vld [vmem:[#allocation10 + $0x14] sm:$0xf]
        %v1604 = vld [vmem:[#allocation10 + $0x18] sm:$0xf]
        %v1605 = vld [vmem:[#allocation10 + $0x1c] sm:$0xf]
        %v1606 = vld [vmem:[#allocation10 + $0x20] sm:$0xf]
        %v1607 = vld [vmem:[#allocation10 + $0x24] sm:$0xf]
        %v1608 = vld [vmem:[#allocation10 + $0x28] sm:$0xf]
        %v1609 = vld [vmem:[#allocation10 + $0x2c] sm:$0xf]
        %v1610 = vld [vmem:[#allocation10 + $0x30] sm:$0xf]
        %v1611 = vld [vmem:[#allocation10 + $0x34] sm:$0xf]
        %v1612 = vld [vmem:[#allocation10 + $0x38] sm:$0xf]
        %v1613 = vld [vmem:[#allocation10 + $0x3c] sm:$0xf]
        %v1614 = vld [vmem:[%s8] sm:$0x1]
        %v1616 = vlaneseq
        %v1617 = vshrl.u32 %v1616, 7
        %v1618 = vsub.s32 0, %v1617
        %v1619 = vrot.slane %v1614, %v1618
        %v1637 = vunpack.c.l.b16 %v1598
        %v1638 = vunpack.c.l.b16 %v1599
        %v1639 = vunpack.c.l.b16 %v1600
        %v1640 = vunpack.c.l.b16 %v1601
        %v1641 = vunpack.c.l.b16 %v1602
        %v1642 = vunpack.c.l.b16 %v1603
        %v1643 = vunpack.c.l.b16 %v1604
        %v1644 = vunpack.c.l.b16 %v1605
        %v1645 = vunpack.c.l.b16 %v1606
        %v1646 = vunpack.c.l.b16 %v1607
        %v1647 = vunpack.c.l.b16 %v1608
        %v1648 = vunpack.c.l.b16 %v1609
        %v1649 = vunpack.c.l.b16 %v1610
        %v1650 = vunpack.c.l.b16 %v1611
        %v1651 = vunpack.c.l.b16 %v1612
        %v1652 = vunpack.c.l.b16 %v1613
        %v1653 = vpack.c.b16 %v1638, %v1637
        %v1654 = vpack.c.b16 %v1640, %v1639
        %v1655 = vpack.c.b16 %v1642, %v1641
        %v1656 = vpack.c.b16 %v1644, %v1643
        %v1657 = vpack.c.b16 %v1646, %v1645
        %v1658 = vpack.c.b16 %v1648, %v1647
        %v1659 = vpack.c.b16 %v1650, %v1649
        %v1660 = vpack.c.b16 %v1652, %v1651
        %1669 = vmatprep.subr.bf16.mxu0 0
        %1670 = vmatpush1.bf16.msra.mxu0 %v1653
        %1671 = vmatprep.subr.bf16.mxu0 0
        %1672 = vmatpush1.bf16.msra.mxu0 %v1654
        %1673 = vmatprep.subr.bf16.mxu0 0
        %1674 = vmatpush1.bf16.msra.mxu0 %v1655
        %1675 = vmatprep.subr.bf16.mxu0 0
        %1676 = vmatpush1.bf16.msra.mxu0 %v1656
        %1677 = vmatprep.subr.bf16.mxu0 0
        %1678 = vmatpush1.bf16.msra.mxu0 %v1657
        %1679 = vmatprep.subr.bf16.mxu0 0
        %1680 = vmatpush1.bf16.msra.mxu0 %v1658
        %1681 = vmatprep.subr.bf16.mxu0 0
        %1682 = vmatpush1.bf16.msra.mxu0 %v1659
        %1683 = vmatprep.subr.bf16.mxu0 0
        %1684 = vmatpush1.bf16.msra.mxu0 %v1660
        %1685 = vmatprep.subr.bf16.mxu0 0
        %1686 = vmatpush1.bf16.msra.mxu0 0
        %1687 = vmatprep.subr.bf16.mxu0 0
        %1688 = vmatpush1.bf16.msra.mxu0 0
        %1689 = vmatprep.subr.bf16.mxu0 0
        %1690 = vmatpush1.bf16.msra.mxu0 0
        %1691 = vmatprep.subr.bf16.mxu0 0
        %1692 = vmatpush1.bf16.msra.mxu0 0
        %1693 = vmatprep.subr.bf16.mxu0 0
        %1694 = vmatpush1.bf16.msra.mxu0 0
        %1695 = vmatprep.subr.bf16.mxu0 0
        %1696 = vmatpush1.bf16.msra.mxu0 0
        %1697 = vmatprep.subr.bf16.mxu0 0
        %1698 = vmatpush1.bf16.msra.mxu0 0
        %1699 = vmatprep.subr.bf16.mxu0 0
        %1700 = vmatpush1.bf16.msra.mxu0 0
        %1701 = vmatprep.mubr.bf16.mxu0 0
        %1702 = vmatmul.mubr.bf16.gmra.mrb[0].mxu0 %v1597
        %v1703 = vpop.f32.mrb[0].mxu0
        %v1704 = vadd.f32 %v1619, %v1703
        %v1705 = vpop.f32.mrb[0].mxu0
        %v1706 = vpop.f32.mrb[0].mxu0
        %v1707 = vadd.f32 %v1619, %v1706
        %v1708 = vpop.f32.mrb[0].mxu0
        %1709 = vdwg.mxu0
        %1710 = vst [vmem:[%s435] sm:$0xff] %v1704
        %1711 = vst [vmem:[%s435 + $0x8] sm:$0xff] %v1707
        %s1712 = sand.u32 %s252, 1
        %s1713 = scalar_lea.sflag [#allocation4], %s1712
        %s1714 = sand.u32 %s252, 1
        %s1715 = smul.addr %s1714, 16
        %s1716 = scalar_lea.vmem [#allocation11], %s1715
        // Predicated region
        $region81: #{tpu_custom_call.1} parent=59 // pred_check
          %p1717 = pneg %p262
        $region82: #{tpu_custom_call.1} parent=59 // pred_check_branch
          %1719 = sbr.rel (%p1717) target = $region84
        $region83: #{tpu_custom_call.1} parent=59 // pred_region
          %s1721 = ssub.s32 256, 256
          %1722 = vsyncadd %s1713, %s1721
          %s1723 = smul.addr %s29, 2
          %s1724 = smul.addr %s1723, 128
          %s1725 = scalar_lea.hbm %s10, %s1724
          %s1726 = sshll.u32 %s1716, 4
          %s1727 = int_to_ptr.vmem [resolvable:$true] %s1726
          %1732 = dma.vmem_to_hbm [thread:$0]  %s1727, 256, %s1725, %s1713, 128, 128, 8
        $region84: #{tpu_custom_call.1} parent=59 // pred_fallthru
          _
      $region60: #{tpu_custom_call.1} parent=5 // pred_fallthru
        _
      %p1733 = scmp.le.s32.totalorder 2, %s24
      // Predicated region
      $region85: #{tpu_custom_call.1} parent=5 // pred_check
        %p1734 = pneg %p1733
      $region86: #{tpu_custom_call.1} parent=5 // pred_check_branch
        %1736 = sbr.rel (%p1734) target = $region88
      $region87: #{tpu_custom_call.1} parent=5 // pred_region
        %s1737 = ssub.s32 %s24, 2
        // Predicated region
        $region89: #{tpu_custom_call.1} parent=87 // pred_check
          %p1738 = pneg %p268
        $region90: #{tpu_custom_call.1} parent=87 // pred_check_branch
          %1740 = sbr.rel (%p1738) target = $region92
        $region91: #{tpu_custom_call.1} parent=87 // pred_region
          %s1741 = sand.u32 %s253, 1
          %s1742 = scalar_lea.sflag [#allocation4], %s1741
          %s1743 = sand.u32 %s253, 1
          %s1744 = smul.addr %s1743, 16
          %s1745 = scalar_lea.vmem [#allocation11], %s1744
          %1746 = dma.done %s1742, 256
        $region92: #{tpu_custom_call.1} parent=87 // pred_fallthru
          _
      $region88: #{tpu_custom_call.1} parent=5 // pred_fallthru
        _
    $region6: #{tpu_custom_call.1} parent=1 // loop_footer
      %s28 = sadd.s32 1, %s24
    $region7: #{tpu_custom_call.1} parent=1 // loop_footer_branch
      %23 = sbr.rel target = $region3
    $region8: #{tpu_custom_call.1} parent=1 // loop_exit
      _
    %1747 = vsyncpa [#allocation3], 1
    %s1748 = scalar_lea.sflag [#allocation3], 1
    %1749 = vsyncpa %s1748, 1
    %1750 = vsyncpa [#allocation6], 1
    %1751 = vsyncpa [#allocation9], 1
    %1752 = vsyncpa [#allocation4], 1
    %s1753 = scalar_lea.sflag [#allocation4], 1
    %1754 = vsyncpa %s1753, 1

</llo_original>
